<compile_context>
chip_gen: v6e
topology: v6e:2x2x1
jax: 0.10.0
libtpu: 0.0.40
codegen_flags: <defaults>
</compile_context>

<pallas_src>
import math

import jax
import jax.numpy as jnp
from jax.experimental import pallas as pl
from jax.experimental.pallas import tpu as pltpu


def diff_attn_kernel(lam_ref, x_ref,
                     wq1_ref, wq2_ref, bq1_ref, bq2_ref,
                     wk1_ref, wk2_ref, bk1_ref, bk2_ref,
                     wv_ref, bv_ref,
                     o_ref,
                     k1t_s, k2t_s, v_s):
    # Grid: (batch, q_tile).  x_ref holds the full (N, d) bf16 sequence of this batch element
    # (resident across the q-tile axis); o_ref holds one (TQ, d) output query tile.
    j = pl.program_id(1)
    n, d = x_ref.shape
    tq = o_ref.shape[0]
    scale = 1.0 / math.sqrt(d)

    # ---- K / V projections: computed once per batch element (at q-tile 0), kept resident in
    # VMEM scratch as bf16 MXU operands for all subsequent query tiles of this batch element.
    # K1/K2 are stored pre-transposed so the score matmul below is native (no per-tile relayout).
    @pl.when(j == 0)
    def _():
        xf = x_ref[...]                                                                  # (N, d) bf16
        k1 = jnp.dot(xf, wk1_ref[...], preferred_element_type=jnp.float32) + bk1_ref[...]
        k2 = jnp.dot(xf, wk2_ref[...], preferred_element_type=jnp.float32) + bk2_ref[...]
        v = jnp.dot(xf, wv_ref[...], preferred_element_type=jnp.float32) + bv_ref[...]
        k1t_s[...] = k1.T.astype(jnp.bfloat16)    # (d, N): transpose once, amortized over q tiles
        k2t_s[...] = k2.T.astype(jnp.bfloat16)    # (d, N)
        v_s[...] = v.astype(jnp.bfloat16)         # (N, d)

    # ---- Q projections for this query tile only (two (d, d) halves: no lane-dim slicing).
    q_start = pl.multiple_of(j * tq, tq)
    xq = x_ref[pl.ds(q_start, tq), :]                                                    # (TQ, d) bf16
    q1 = jnp.dot(xq, wq1_ref[...], preferred_element_type=jnp.float32) + bq1_ref[...]
    q2 = jnp.dot(xq, wq2_ref[...], preferred_element_type=jnp.float32) + bq2_ref[...]

    # Fold 1/sqrt(d) into the (TQ, d) q tiles (cheaper than scaling the (TQ, N) scores),
    # then cast to bf16 MXU operands (accumulation stays f32).
    q1 = (q1 * scale).astype(jnp.bfloat16)
    q2 = (q2 * scale).astype(jnp.bfloat16)

    # ---- Scores: native A[m,k] @ B[k,n] against the pre-transposed resident keys.
    a1 = jnp.dot(q1, k1t_s[...], preferred_element_type=jnp.float32)                     # (TQ, N) f32
    a2 = jnp.dot(q2, k2t_s[...], preferred_element_type=jnp.float32)                     # (TQ, N) f32

    # Numerically-stable softmax over the full (resident) key axis.  lambda is folded into the
    # (TQ, 1) reciprocal of the second branch so only two (TQ, N) multiplies + one subtract remain.
    m1 = jnp.max(a1, axis=-1, keepdims=True)
    m2 = jnp.max(a2, axis=-1, keepdims=True)
    e1 = jnp.exp(a1 - m1)
    e2 = jnp.exp(a2 - m2)
    r1 = pl.reciprocal(jnp.sum(e1, axis=-1, keepdims=True), approx=True)
    r2 = pl.reciprocal(jnp.sum(e2, axis=-1, keepdims=True), approx=True)
    lam = lam_ref[0]                                                                     # SMEM scalar
    diff = e1 * r1 - e2 * (lam * r2)                                                     # f32 (VPU)

    out = jnp.dot(diff.astype(jnp.bfloat16), v_s[...], preferred_element_type=jnp.float32)
    o_ref[...] = out.astype(o_ref.dtype)


def _vmem_limit_bytes():
    """Generation-aware VMEM limit: 3/4 of physical capacity (headroom for Mosaic scratch)."""
    phys = 64 * 1024 * 1024          # conservative (v7x) default if the query is unavailable
    try:
        info = pltpu.get_tpu_info()
        phys = int(getattr(info, "vmem_capacity_bytes", phys))
    except Exception:
        pass
    return (phys * 3) // 4


def _pick_q_tile(n, d, vmem_limit_bytes):
    """Largest power-of-two query tile (<= 512) dividing n whose f32 (TQ, N) softmax temporaries
    fit next to the resident bf16 K/V scratch, double-buffered bf16 X block and the weights."""
    resident = 3 * n * d * 2 + 2 * n * d * 2 + 5 * d * d * 2   # K1^T/K2^T/V + X (x2 bufs) + weights
    avail = max(vmem_limit_bytes - resident, 4 * 1024 * 1024)
    for tq in (512, 256, 128, 64, 32, 16, 8):
        if tq <= n and n % tq == 0 and (6 * tq * n * 4 + 2 * tq * d * 4) <= avail:
            return tq
    # TODO(synk): for very long sequences on v7x (64 MiB VMEM), chunk the key axis with an online
    # softmax instead of keeping full (TQ, N) score tiles resident.
    return n


def diff_attn(x, lambda_, wq, bq, wk, bk, wv, bv, *, q_tile=None):
    b, n, d = x.shape
    vmem_limit = _vmem_limit_bytes()
    tq = q_tile if q_tile is not None else _pick_q_tile(n, d, vmem_limit)
    tq = min(tq, n)
    assert n % tq == 0, "sequence length must be divisible by the query tile"
    n_q = n // tq

    # bf16 MXU operands everywhere (f32 accumulation in the kernel); biases stay f32.
    xb = x.astype(jnp.bfloat16)
    wq1, wq2 = wq[:, :d].astype(jnp.bfloat16), wq[:, d:].astype(jnp.bfloat16)
    wk1, wk2 = wk[:, :d].astype(jnp.bfloat16), wk[:, d:].astype(jnp.bfloat16)
    wvb = wv.astype(jnp.bfloat16)
    bq1, bq2 = bq[:, :d], bq[:, d:]
    bk1, bk2 = bk[:, :d], bk[:, d:]
    lam = jnp.asarray([lambda_], dtype=jnp.float32)

    # Constant index_maps + single buffering: weights/biases are DMA'd once and kept resident
    # for the whole grid (no wasted second pipeline buffer).
    w_spec = pl.BlockSpec((d, d), lambda i, j: (0, 0), pipeline_mode=pl.Buffered(1))
    b_spec = pl.BlockSpec((1, d), lambda i, j: (0, 0), pipeline_mode=pl.Buffered(1))

    flops = int(b * (10 * n * d * d + 6 * n * n * d))
    transcendentals = int(2 * b * n * n)
    bytes_accessed = int(b * n * d * 2       # X (bf16) read
                         + b * n * d * 4     # output (f32) write
                         + 5 * d * d * 2     # weights (bf16)
                         + 5 * d * 4 + 4)    # biases + lambda

    # TODO(synk): for v7x small-batch (b == 1) shapes, precompute K/V projections outside the
    # kernel so the q-tile axis carries no scratch state and can be marked "parallel" (2 TCs).
    return pl.pallas_call(
        diff_attn_kernel,
        out_shape=jax.ShapeDtypeStruct((b, n, d), jnp.float32),
        grid_spec=pltpu.PrefetchScalarGridSpec(
            num_scalar_prefetch=0,
            grid=(b, n_q),
            in_specs=[
                pl.BlockSpec(memory_space=pltpu.SMEM),                    # lambda_ scalar
                pl.BlockSpec((None, n, d), lambda i, j: (i, 0, 0)),       # X: full seq, resident over j
                w_spec, w_spec, b_spec, b_spec,                           # W_q halves + bias halves
                w_spec, w_spec, b_spec, b_spec,                           # W_k halves + bias halves
                w_spec, b_spec,                                           # W_v + bias
            ],
            out_specs=pl.BlockSpec((None, tq, d), lambda i, j: (i, j, 0)),
            scratch_shapes=[
                pltpu.VMEM((d, n), jnp.bfloat16),   # K1^T (resident per batch element)
                pltpu.VMEM((d, n), jnp.bfloat16),   # K2^T
                pltpu.VMEM((n, d), jnp.bfloat16),   # V
            ],
        ),
        compiler_params=pltpu.CompilerParams(
            # NOTE: the q-tile axis MUST remain "arbitrary" (sequential, starting at 0 for every
            # batch index) because the K/V scratch computed at j == 0 carries state across it.
            dimension_semantics=("parallel", "arbitrary"),
            vmem_limit_bytes=vmem_limit,
        ),
        cost_estimate=pl.CostEstimate(
            flops=flops, transcendentals=transcendentals, bytes_accessed=bytes_accessed),
    )(lam, xb, wq1, wq2, bq1, bq2, wk1, wk2, bk1, bk2, wvb, bv)


def diff_attn_ref(x, lambda_, wq, bq, wk, bk, wv, bv):
    d = x.shape[-1]
    q = x @ wq + bq[0]
    k = x @ wk + bk[0]
    v = x @ wv + bv[0]
    q1, q2 = q[..., :d], q[..., d:]
    k1, k2 = k[..., :d], k[..., d:]
    s = 1.0 / math.sqrt(d)
    a1 = jnp.einsum("bnd,bmd->bnm", q1, k1) * s
    a2 = jnp.einsum("bnd,bmd->bnm", q2, k2) * s
    p1 = jax.nn.softmax(a1, axis=-1)
    p2 = jax.nn.softmax(a2, axis=-1)
    return jnp.einsum("bnm,bmd->bnd", p1 - lambda_ * p2, v)


if __name__ == "__main__":
    key = jax.random.PRNGKey(0)
    b, n, d = 2, 8, 32
    kx, kq, kbq, kk, kbk, kv, kbv = jax.random.split(key, 7)

    x = jax.random.normal(kx, (b, n, d), dtype=jnp.float32)
    # Deterministic parameter init mirroring nn.Linear's uniform(-1/sqrt(in), 1/sqrt(in)).
    bound = 1.0 / math.sqrt(d)
    wq = jax.random.uniform(kq, (d, 2 * d), jnp.float32, -bound, bound)
    bq = jax.random.uniform(kbq, (1, 2 * d), jnp.float32, -bound, bound)
    wk = jax.random.uniform(kk, (d, 2 * d), jnp.float32, -bound, bound)
    bk = jax.random.uniform(kbk, (1, 2 * d), jnp.float32, -bound, bound)
    wv = jax.random.uniform(kv, (d, d), jnp.float32, -bound, bound)
    bv = jax.random.uniform(kbv, (1, d), jnp.float32, -bound, bound)

    lambda_ = 0.8

    out = jax.block_until_ready(diff_attn(x, lambda_, wq, bq, wk, bk, wv, bv))
    ref = diff_attn_ref(x, lambda_, wq, bq, wk, bk, wv, bv)

    assert out.shape == (b, n, d)
    # bf16 MXU operands (f32 accumulation) => bf16-attention level tolerance.
    assert jnp.allclose(out, ref, atol=5e-2, rtol=5e-2), float(jnp.max(jnp.abs(out - ref)))

    print("KERNEL_OK")
</pallas_src>

<mosaic_0001>
module attributes {stable_mosaic.version = 11 : i64} {
  func.func @diff_attn_kernel(%arg0: i32, %arg1: i32, %arg2: memref<1xf32, #tpu.memory_space<smem>>, %arg3: memref<1x8x32xbf16, #tpu.memory_space<vmem>>, %arg4: memref<32x32xbf16, #tpu.memory_space<vmem>>, %arg5: memref<32x32xbf16, #tpu.memory_space<vmem>>, %arg6: memref<1x32xf32, #tpu.memory_space<vmem>>, %arg7: memref<1x32xf32, #tpu.memory_space<vmem>>, %arg8: memref<32x32xbf16, #tpu.memory_space<vmem>>, %arg9: memref<32x32xbf16, #tpu.memory_space<vmem>>, %arg10: memref<1x32xf32, #tpu.memory_space<vmem>>, %arg11: memref<1x32xf32, #tpu.memory_space<vmem>>, %arg12: memref<32x32xbf16, #tpu.memory_space<vmem>>, %arg13: memref<1x32xf32, #tpu.memory_space<vmem>>, %arg14: memref<1x8x32xf32, #tpu.memory_space<vmem>>, %arg15: memref<32x8xbf16, #tpu.memory_space<vmem>>, %arg16: memref<32x8xbf16, #tpu.memory_space<vmem>>, %arg17: memref<8x32xbf16, #tpu.memory_space<vmem>>) attributes {dimension_semantics = [#tpu.dimension_semantics<parallel>, #tpu.dimension_semantics<arbitrary>], iteration_bounds = array<i64: 2, 1>, scalar_prefetch = 0 : i64, scratch_operands = 3 : i64, tpu.core_type = #tpu.core_type<tc>, window_params = [{transform_indices = @transform_0, window_bounds = array<i64: 1>}, {transform_indices = @transform_1, window_bounds = array<i64: 1, 8, 32>}, {pipeline_mode = #tpu.pipeline_mode<synchronous>, transform_indices = @transform_2, window_bounds = array<i64: 32, 32>}, {pipeline_mode = #tpu.pipeline_mode<synchronous>, transform_indices = @transform_3, window_bounds = array<i64: 32, 32>}, {pipeline_mode = #tpu.pipeline_mode<synchronous>, transform_indices = @transform_4, window_bounds = array<i64: 1, 32>}, {pipeline_mode = #tpu.pipeline_mode<synchronous>, transform_indices = @transform_5, window_bounds = array<i64: 1, 32>}, {pipeline_mode = #tpu.pipeline_mode<synchronous>, transform_indices = @transform_6, window_bounds = array<i64: 32, 32>}, {pipeline_mode = #tpu.pipeline_mode<synchronous>, transform_indices = @transform_7, window_bounds = array<i64: 32, 32>}, {pipeline_mode = #tpu.pipeline_mode<synchronous>, transform_indices = @transform_8, window_bounds = array<i64: 1, 32>}, {pipeline_mode = #tpu.pipeline_mode<synchronous>, transform_indices = @transform_9, window_bounds = array<i64: 1, 32>}, {pipeline_mode = #tpu.pipeline_mode<synchronous>, transform_indices = @transform_10, window_bounds = array<i64: 32, 32>}, {pipeline_mode = #tpu.pipeline_mode<synchronous>, transform_indices = @transform_11, window_bounds = array<i64: 1, 32>}, {transform_indices = @transform_12, window_bounds = array<i64: 1, 8, 32>}]} {
    %c0_i32 = arith.constant 0 : i32
    %0 = arith.cmpi eq, %arg1, %c0_i32 : i32
    %1 = arith.extui %0 : i1 to i32
    %c0_i32_0 = arith.constant 0 : i32
    %2 = arith.cmpi ne, %1, %c0_i32_0 : i32
    scf.if %2 {
      %c0_30 = arith.constant 0 : index
      %c0_31 = arith.constant 0 : index
      %c0_32 = arith.constant 0 : index
      %58 = vector.load %arg3[%c0_30, %c0_31, %c0_32] : memref<1x8x32xbf16, #tpu.memory_space<vmem>>, vector<1x8x32xbf16>
      %59 = vector.shape_cast %58 : vector<1x8x32xbf16> to vector<8x32xbf16>
      %c0_33 = arith.constant 0 : index
      %c0_34 = arith.constant 0 : index
      %60 = vector.load %arg8[%c0_33, %c0_34] : memref<32x32xbf16, #tpu.memory_space<vmem>>, vector<32x32xbf16>
      %cst_35 = arith.constant dense<0.000000e+00> : vector<8x32xf32>
      %61 = tpu.matmul %59, %60, %cst_35 {dimension_numbers = #tpu.dot_dimension_numbers<[1], [0], [0], [1], [0, 0, 1, 1], [], []>} : vector<8x32xbf16>, vector<32x32xbf16>, vector<8x32xf32> -> vector<8x32xf32>
      %c0_36 = arith.constant 0 : index
      %c0_37 = arith.constant 0 : index
      %62 = vector.load %arg10[%c0_36, %c0_37] : memref<1x32xf32, #tpu.memory_space<vmem>>, vector<1x32xf32>
      %63 = vector.broadcast %62 : vector<1x32xf32> to vector<8x32xf32>
      %64 = arith.addf %61, %63 : vector<8x32xf32>
      %c0_38 = arith.constant 0 : index
      %c0_39 = arith.constant 0 : index
      %65 = vector.load %arg9[%c0_38, %c0_39] : memref<32x32xbf16, #tpu.memory_space<vmem>>, vector<32x32xbf16>
      %cst_40 = arith.constant dense<0.000000e+00> : vector<8x32xf32>
      %66 = tpu.matmul %59, %65, %cst_40 {dimension_numbers = #tpu.dot_dimension_numbers<[1], [0], [0], [1], [0, 0, 1, 1], [], []>} : vector<8x32xbf16>, vector<32x32xbf16>, vector<8x32xf32> -> vector<8x32xf32>
      %c0_41 = arith.constant 0 : index
      %c0_42 = arith.constant 0 : index
      %67 = vector.load %arg11[%c0_41, %c0_42] : memref<1x32xf32, #tpu.memory_space<vmem>>, vector<1x32xf32>
      %68 = vector.broadcast %67 : vector<1x32xf32> to vector<8x32xf32>
      %69 = arith.addf %66, %68 : vector<8x32xf32>
      %c0_43 = arith.constant 0 : index
      %c0_44 = arith.constant 0 : index
      %70 = vector.load %arg12[%c0_43, %c0_44] : memref<32x32xbf16, #tpu.memory_space<vmem>>, vector<32x32xbf16>
      %cst_45 = arith.constant dense<0.000000e+00> : vector<8x32xf32>
      %71 = tpu.matmul %59, %70, %cst_45 {dimension_numbers = #tpu.dot_dimension_numbers<[1], [0], [0], [1], [0, 0, 1, 1], [], []>} : vector<8x32xbf16>, vector<32x32xbf16>, vector<8x32xf32> -> vector<8x32xf32>
      %c0_46 = arith.constant 0 : index
      %c0_47 = arith.constant 0 : index
      %72 = vector.load %arg13[%c0_46, %c0_47] : memref<1x32xf32, #tpu.memory_space<vmem>>, vector<1x32xf32>
      %73 = vector.broadcast %72 : vector<1x32xf32> to vector<8x32xf32>
      %74 = arith.addf %71, %73 : vector<8x32xf32>
      %75 = tpu.transpose %64, [1, 0] : vector<8x32xf32> -> vector<32x8xf32>
      %76 = arith.truncf %75 : vector<32x8xf32> to vector<32x8xbf16>
      %c0_48 = arith.constant 0 : index
      %c0_49 = arith.constant 0 : index
      %77 = vector.load %arg15[%c0_48, %c0_49] : memref<32x8xbf16, #tpu.memory_space<vmem>>, vector<32x8xbf16>
      tpu.vector_store %arg15[%c0_48, %c0_49], %76 {strides = array<i32>} : memref<32x8xbf16, #tpu.memory_space<vmem>>, vector<32x8xbf16>,
      %78 = tpu.transpose %69, [1, 0] : vector<8x32xf32> -> vector<32x8xf32>
      %79 = arith.truncf %78 : vector<32x8xf32> to vector<32x8xbf16>
      %c0_50 = arith.constant 0 : index
      %c0_51 = arith.constant 0 : index
      %80 = vector.load %arg16[%c0_50, %c0_51] : memref<32x8xbf16, #tpu.memory_space<vmem>>, vector<32x8xbf16>
      tpu.vector_store %arg16[%c0_50, %c0_51], %79 {strides = array<i32>} : memref<32x8xbf16, #tpu.memory_space<vmem>>, vector<32x8xbf16>,
      %81 = arith.truncf %74 : vector<8x32xf32> to vector<8x32xbf16>
      %c0_52 = arith.constant 0 : index
      %c0_53 = arith.constant 0 : index
      %82 = vector.load %arg17[%c0_52, %c0_53] : memref<8x32xbf16, #tpu.memory_space<vmem>>, vector<8x32xbf16>
      tpu.vector_store %arg17[%c0_52, %c0_53], %81 {strides = array<i32>} : memref<8x32xbf16, #tpu.memory_space<vmem>>, vector<8x32xbf16>,
    } else {
    }
    %c8_i32 = arith.constant 8 : i32
    %3 = arith.muli %arg1, %c8_i32 : i32
    %4 = tpu.assume_multiple %3, 8 : i32
    %c0 = arith.constant 0 : index
    %5 = arith.index_cast %4 : i32 to index
    %c0_1 = arith.constant 0 : index
    %6 = vector.load %arg3[%c0, %5, %c0_1] : memref<1x8x32xbf16, #tpu.memory_space<vmem>>, vector<1x8x32xbf16>
    %7 = vector.shape_cast %6 : vector<1x8x32xbf16> to vector<8x32xbf16>
    %c0_2 = arith.constant 0 : index
    %c0_3 = arith.constant 0 : index
    %8 = vector.load %arg4[%c0_2, %c0_3] : memref<32x32xbf16, #tpu.memory_space<vmem>>, vector<32x32xbf16>
    %cst = arith.constant dense<0.000000e+00> : vector<8x32xf32>
    %9 = tpu.matmul %7, %8, %cst {dimension_numbers = #tpu.dot_dimension_numbers<[1], [0], [0], [1], [0, 0, 1, 1], [], []>} : vector<8x32xbf16>, vector<32x32xbf16>, vector<8x32xf32> -> vector<8x32xf32>
    %c0_4 = arith.constant 0 : index
    %c0_5 = arith.constant 0 : index
    %10 = vector.load %arg6[%c0_4, %c0_5] : memref<1x32xf32, #tpu.memory_space<vmem>>, vector<1x32xf32>
    %11 = vector.broadcast %10 : vector<1x32xf32> to vector<8x32xf32>
    %12 = arith.addf %9, %11 : vector<8x32xf32>
    %c0_6 = arith.constant 0 : index
    %c0_7 = arith.constant 0 : index
    %13 = vector.load %arg5[%c0_6, %c0_7] : memref<32x32xbf16, #tpu.memory_space<vmem>>, vector<32x32xbf16>
    %cst_8 = arith.constant dense<0.000000e+00> : vector<8x32xf32>
    %14 = tpu.matmul %7, %13, %cst_8 {dimension_numbers = #tpu.dot_dimension_numbers<[1], [0], [0], [1], [0, 0, 1, 1], [], []>} : vector<8x32xbf16>, vector<32x32xbf16>, vector<8x32xf32> -> vector<8x32xf32>
    %c0_9 = arith.constant 0 : index
    %c0_10 = arith.constant 0 : index
    %15 = vector.load %arg7[%c0_9, %c0_10] : memref<1x32xf32, #tpu.memory_space<vmem>>, vector<1x32xf32>
    %16 = vector.broadcast %15 : vector<1x32xf32> to vector<8x32xf32>
    %17 = arith.addf %14, %16 : vector<8x32xf32>
    %cst_11 = arith.constant 0.176776692 : f32
    %18 = vector.broadcast %cst_11 : f32 to vector<8x32xf32>
    %19 = arith.mulf %12, %18 : vector<8x32xf32>
    %20 = arith.truncf %19 : vector<8x32xf32> to vector<8x32xbf16>
    %cst_12 = arith.constant 0.176776692 : f32
    %21 = vector.broadcast %cst_12 : f32 to vector<8x32xf32>
    %22 = arith.mulf %17, %21 : vector<8x32xf32>
    %23 = arith.truncf %22 : vector<8x32xf32> to vector<8x32xbf16>
    %c0_13 = arith.constant 0 : index
    %c0_14 = arith.constant 0 : index
    %24 = vector.load %arg15[%c0_13, %c0_14] : memref<32x8xbf16, #tpu.memory_space<vmem>>, vector<32x8xbf16>
    %cst_15 = arith.constant dense<0.000000e+00> : vector<8x8xf32>
    %25 = tpu.matmul %20, %24, %cst_15 {dimension_numbers = #tpu.dot_dimension_numbers<[1], [0], [0], [1], [0, 0, 1, 1], [], []>} : vector<8x32xbf16>, vector<32x8xbf16>, vector<8x8xf32> -> vector<8x8xf32>
    %c0_16 = arith.constant 0 : index
    %c0_17 = arith.constant 0 : index
    %26 = vector.load %arg16[%c0_16, %c0_17] : memref<32x8xbf16, #tpu.memory_space<vmem>>, vector<32x8xbf16>
    %cst_18 = arith.constant dense<0.000000e+00> : vector<8x8xf32>
    %27 = tpu.matmul %23, %26, %cst_18 {dimension_numbers = #tpu.dot_dimension_numbers<[1], [0], [0], [1], [0, 0, 1, 1], [], []>} : vector<8x32xbf16>, vector<32x8xbf16>, vector<8x8xf32> -> vector<8x8xf32>
    %cst_19 = arith.constant dense<0xFF800000> : vector<8xf32>
    %28 = vector.multi_reduction <maximumf>, %25, %cst_19 [1] : vector<8x8xf32> to vector<8xf32>
    %29 = vector.shape_cast %28 : vector<8xf32> to vector<8x1xf32>
    %cst_20 = arith.constant dense<0xFF800000> : vector<8xf32>
    %30 = vector.multi_reduction <maximumf>, %27, %cst_20 [1] : vector<8x8xf32> to vector<8xf32>
    %31 = vector.shape_cast %30 : vector<8xf32> to vector<8x1xf32>
    %32 = vector.broadcast %29 : vector<8x1xf32> to vector<8x8xf32>
    %33 = arith.subf %25, %32 : vector<8x8xf32>
    %34 = math.exp %33 : vector<8x8xf32>
    %35 = vector.broadcast %31 : vector<8x1xf32> to vector<8x8xf32>
    %36 = arith.subf %27, %35 : vector<8x8xf32>
    %37 = math.exp %36 : vector<8x8xf32>
    %cst_21 = arith.constant dense<0.000000e+00> : vector<8xf32>
    %38 = vector.multi_reduction <add>, %34, %cst_21 [1] : vector<8x8xf32> to vector<8xf32>
    %39 = vector.shape_cast %38 : vector<8xf32> to vector<8x1xf32>
    %40 = tpu.reciprocal %39 {approx = true} : vector<8x1xf32> -> vector<8x1xf32>
    %cst_22 = arith.constant dense<0.000000e+00> : vector<8xf32>
    %41 = vector.multi_reduction <add>, %37, %cst_22 [1] : vector<8x8xf32> to vector<8xf32>
    %42 = vector.shape_cast %41 : vector<8xf32> to vector<8x1xf32>
    %43 = tpu.reciprocal %42 {approx = true} : vector<8x1xf32> -> vector<8x1xf32>
    %c0_23 = arith.constant 0 : index
    %44 = memref.load %arg2[%c0_23] : memref<1xf32, #tpu.memory_space<smem>>
    %45 = vector.broadcast %40 : vector<8x1xf32> to vector<8x8xf32>
    %46 = arith.mulf %34, %45 : vector<8x8xf32>
    %47 = vector.broadcast %44 : f32 to vector<8x1xf32>
    %48 = arith.mulf %47, %43 : vector<8x1xf32>
    %49 = vector.broadcast %48 : vector<8x1xf32> to vector<8x8xf32>
    %50 = arith.mulf %37, %49 : vector<8x8xf32>
    %51 = arith.subf %46, %50 : vector<8x8xf32>
    %52 = arith.truncf %51 : vector<8x8xf32> to vector<8x8xbf16>
    %c0_24 = arith.constant 0 : index
    %c0_25 = arith.constant 0 : index
    %53 = vector.load %arg17[%c0_24, %c0_25] : memref<8x32xbf16, #tpu.memory_space<vmem>>, vector<8x32xbf16>
    %cst_26 = arith.constant dense<0.000000e+00> : vector<8x32xf32>
    %54 = tpu.matmul %52, %53, %cst_26 {dimension_numbers = #tpu.dot_dimension_numbers<[1], [0], [0], [1], [0, 0, 1, 1], [], []>} : vector<8x8xbf16>, vector<8x32xbf16>, vector<8x32xf32> -> vector<8x32xf32>
    %c0_27 = arith.constant 0 : index
    %c0_28 = arith.constant 0 : index
    %c0_29 = arith.constant 0 : index
    %55 = vector.load %arg14[%c0_27, %c0_28, %c0_29] : memref<1x8x32xf32, #tpu.memory_space<vmem>>, vector<1x8x32xf32>
    %56 = vector.shape_cast %55 : vector<1x8x32xf32> to vector<8x32xf32>
    %57 = vector.shape_cast %54 : vector<8x32xf32> to vector<1x8x32xf32>
    tpu.vector_store %arg14[%c0_27, %c0_28, %c0_29], %57 {strides = array<i32>} : memref<1x8x32xf32, #tpu.memory_space<vmem>>, vector<1x8x32xf32>,
    return
  }
  func.func @transform_0(%arg0: i32, %arg1: i32) -> i32 {
    %c0_i32 = arith.constant 0 : i32
    %c0_i32_0 = arith.constant 0 : i32
    return %c0_i32 : i32
  }
  func.func @transform_1(%arg0: i32, %arg1: i32) -> (i32, i32, i32) {
    %c0_i32 = arith.constant 0 : i32
    %c0_i32_0 = arith.constant 0 : i32
    %c0_i32_1 = arith.constant 0 : i32
    return %arg0, %c0_i32, %c0_i32_0 : i32, i32, i32
  }
  func.func @transform_2(%arg0: i32, %arg1: i32) -> (i32, i32) {
    %c0_i32 = arith.constant 0 : i32
    %c0_i32_0 = arith.constant 0 : i32
    %c0_i32_1 = arith.constant 0 : i32
    return %c0_i32, %c0_i32_0 : i32, i32
  }
  func.func @transform_3(%arg0: i32, %arg1: i32) -> (i32, i32) {
    %c0_i32 = arith.constant 0 : i32
    %c0_i32_0 = arith.constant 0 : i32
    %c0_i32_1 = arith.constant 0 : i32
    return %c0_i32, %c0_i32_0 : i32, i32
  }
  func.func @transform_4(%arg0: i32, %arg1: i32) -> (i32, i32) {
    %c0_i32 = arith.constant 0 : i32
    %c0_i32_0 = arith.constant 0 : i32
    %c0_i32_1 = arith.constant 0 : i32
    return %c0_i32, %c0_i32_0 : i32, i32
  }
  func.func @transform_5(%arg0: i32, %arg1: i32) -> (i32, i32) {
    %c0_i32 = arith.constant 0 : i32
    %c0_i32_0 = arith.constant 0 : i32
    %c0_i32_1 = arith.constant 0 : i32
    return %c0_i32, %c0_i32_0 : i32, i32
  }
  func.func @transform_6(%arg0: i32, %arg1: i32) -> (i32, i32) {
    %c0_i32 = arith.constant 0 : i32
    %c0_i32_0 = arith.constant 0 : i32
    %c0_i32_1 = arith.constant 0 : i32
    return %c0_i32, %c0_i32_0 : i32, i32
  }
  func.func @transform_7(%arg0: i32, %arg1: i32) -> (i32, i32) {
    %c0_i32 = arith.constant 0 : i32
    %c0_i32_0 = arith.constant 0 : i32
    %c0_i32_1 = arith.constant 0 : i32
    return %c0_i32, %c0_i32_0 : i32, i32
  }
  func.func @transform_8(%arg0: i32, %arg1: i32) -> (i32, i32) {
    %c0_i32 = arith.constant 0 : i32
    %c0_i32_0 = arith.constant 0 : i32
    %c0_i32_1 = arith.constant 0 : i32
    return %c0_i32, %c0_i32_0 : i32, i32
  }
  func.func @transform_9(%arg0: i32, %arg1: i32) -> (i32, i32) {
    %c0_i32 = arith.constant 0 : i32
    %c0_i32_0 = arith.constant 0 : i32
    %c0_i32_1 = arith.constant 0 : i32
    return %c0_i32, %c0_i32_0 : i32, i32
  }
  func.func @transform_10(%arg0: i32, %arg1: i32) -> (i32, i32) {
    %c0_i32 = arith.constant 0 : i32
    %c0_i32_0 = arith.constant 0 : i32
    %c0_i32_1 = arith.constant 0 : i32
    return %c0_i32, %c0_i32_0 : i32, i32
  }
  func.func @transform_11(%arg0: i32, %arg1: i32) -> (i32, i32) {
    %c0_i32 = arith.constant 0 : i32
    %c0_i32_0 = arith.constant 0 : i32
    %c0_i32_1 = arith.constant 0 : i32
    return %c0_i32, %c0_i32_0 : i32, i32
  }
  func.func @transform_12(%arg0: i32, %arg1: i32) -> (i32, i32, i32) {
    %c0_i32 = arith.constant 0 : i32
    %c0_i32_0 = arith.constant 0 : i32
    return %arg0, %arg1, %c0_i32 : i32, i32, i32
  }
}

</mosaic_0001>

<llo_original>
// kernel: tpu_custom_call.1
$region0: #{tpu_custom_call.1}
  #allocation0 [shape = 'u32[]', space=smem, size = 0x4, offset = 0x4, fixed_abs, tag = 'smem constant byte address 0x4 - core index']
  #allocation1 [shape = 'u32[144,128]{1,0:T(1,128)}', space=vmem, size = 0x12000, scoped, tag = 'internal scratch']
  #allocation2 [shape = 'bf16[32,8]{1,0:T(8,128)(2,1)}', space=vmem, size = 0x2000, scoped, tag = 'scratch operand']
  #allocation3 [shape = 'bf16[32,8]{1,0:T(8,128)(2,1)}', space=vmem, size = 0x2000, scoped, tag = 'scratch operand']
  #allocation4 [shape = 'bf16[8,32]{1,0:T(8,128)(2,1)}', space=vmem, size = 0x800, scoped, tag = 'scratch operand']
  #allocation5 [shape = 'f32[1]{0:T(128)S(6)}', space=smem, size = 0x200, scoped, tag = 'scoped memory for tpu_custom_call.1']
  %s0 = inlined_call_operand.<no memory space> [shape: f32[1], index: 0, kind: input, shape index: {}]
  %s1 = inlined_call_operand.hbm [shape: bf16[2,8,32], index: 1, kind: input, shape index: {}]
  %s2 = inlined_call_operand.hbm [shape: bf16[32,32], index: 2, kind: input, shape index: {}]
  %s3 = inlined_call_operand.hbm [shape: bf16[32,32], index: 3, kind: input, shape index: {}]
  %s4 = inlined_call_operand.vmem [shape: f32[1,32], index: 4, kind: input, shape index: {}]
  %s5 = inlined_call_operand.vmem [shape: f32[1,32], index: 5, kind: input, shape index: {}]
  %s6 = inlined_call_operand.hbm [shape: bf16[32,32], index: 6, kind: input, shape index: {}]
  %s7 = inlined_call_operand.hbm [shape: bf16[32,32], index: 7, kind: input, shape index: {}]
  %s8 = inlined_call_operand.hbm [shape: f32[1,32], index: 8, kind: input, shape index: {}]
  %s9 = inlined_call_operand.hbm [shape: f32[1,32], index: 9, kind: input, shape index: {}]
  %s10 = inlined_call_operand.vmem [shape: bf16[32,32], index: 10, kind: input, shape index: {}]
  %s11 = inlined_call_operand.vmem [shape: f32[1,32], index: 11, kind: input, shape index: {}]
  %s12 = inlined_call_operand.hbm [shape: f32[2,8,32], index: 12, kind: output, shape index: {}]
  %s13 = sld [smem:[#allocation0]]
  $region113: #{tpu_custom_call.1} parent=0
    _
  %s15 = ssub.s32 1, %s13
  %s16 = scalar_select 0, %s15, %s13
  %17 = sst [smem:[#allocation5]] %s0
  $region1: #{tpu_custom_call.1} parent=0
    #allocation6 [shape = 'u8[4096]{0}', space=vmem, size = 0x1000, scoped, tag = 'input window, operand 1']
    #allocation7 [shape = 's32[2]{0}', space=sflag, size = 0x8, scoped, tag = 'scoped memory for tpu_custom_call.1']
    #allocation8 [shape = 's32[2]{0}', space=sflag, size = 0x8, scoped, tag = 'scoped memory for tpu_custom_call.1']
    #allocation9 [shape = 'u8[8192]{0}', space=vmem, size = 0x2000, scoped, tag = 'input window, operand 2, single buffered']
    #allocation10 [shape = 's32[1]{0}', space=sflag, size = 0x4, scoped, tag = 'scoped memory for tpu_custom_call.1']
    #allocation11 [shape = 'u8[8192]{0}', space=vmem, size = 0x2000, scoped, tag = 'input window, operand 3, single buffered']
    #allocation12 [shape = 'u8[8192]{0}', space=vmem, size = 0x2000, scoped, tag = 'input window, operand 6, single buffered']
    #allocation13 [shape = 's32[1]{0}', space=sflag, size = 0x4, scoped, tag = 'scoped memory for tpu_custom_call.1']
    #allocation14 [shape = 'u8[8192]{0}', space=vmem, size = 0x2000, scoped, tag = 'input window, operand 7, single buffered']
    #allocation15 [shape = 'u8[512]{0}', space=vmem, size = 0x400, scoped, tag = 'input window, operand 8, single buffered']
    #allocation16 [shape = 's32[1]{0}', space=sflag, size = 0x4, scoped, tag = 'scoped memory for tpu_custom_call.1']
    #allocation17 [shape = 'u8[512]{0}', space=vmem, size = 0x400, scoped, tag = 'input window, operand 9, single buffered']
    #allocation18 [shape = 'u8[8192]{0}', space=vmem, size = 0x2000, scoped, tag = 'output window, operand 0']
    %18 = vsyncpa [#allocation7], 0
    %s19 = scalar_lea.sflag [#allocation7], 1
    %20 = vsyncpa %s19, 0
    %21 = vsyncpa [#allocation10], 0
    %22 = vsyncpa [#allocation13], 0
    %23 = vsyncpa [#allocation16], 0
    %24 = vsyncpa [#allocation8], 0
    %s25 = scalar_lea.sflag [#allocation8], 1
    %26 = vsyncpa %s25, 0
    loop: start=0, step=1, limit=4
    $region2: #{tpu_custom_call.1} parent=1 // loop_pre_header
      _
    $region3: #{tpu_custom_call.1} parent=1 // loop_header
      %s28 = sphi 0, %s32
      %p29 = scmp.ge.s32.totalorder %s28, 4
      %s35 = sphi 0, %s47
      %s36 = sphi 0, %s43
      %s37 = sphi 0, %s35
      %s38 = sphi 0, %s36
      %s39 = sphi 0, %s37
      %s40 = sphi 0, %s38
      %s48 = sphi 0, %s48
      %s50 = sphi 0, %s48
      %s51 = sphi 0, %s50
      %s65 = sphi 0, %s51
      %s71 = sphi 0, %s73
      %s74 = sphi 0, %s71
      %s75 = sphi 0, %s74
      %s91 = sphi 0, %s75
      %s95 = sphi 0, %s95
      %s97 = sphi 0, %s95
      %s98 = sphi 0, %s97
      %s112 = sphi 0, %s98
      %s116 = sphi 0, %s116
      %s118 = sphi 0, %s116
      %s119 = sphi 0, %s118
      %s133 = sphi 0, %s119
      %s137 = sphi 0, %s137
      %s139 = sphi 0, %s137
      %s140 = sphi 0, %s139
      %s154 = sphi 0, %s140
      %s158 = sphi 0, %s158
      %s160 = sphi 0, %s158
      %s161 = sphi 0, %s160
      %s175 = sphi 0, %s161
      %s179 = sphi 0, %s179
      %s181 = sphi 0, %s179
      %s182 = sphi 0, %s181
      %s196 = sphi 0, %s182
      %s200 = sphi 0, %s200
      %s202 = sphi 0, %s200
      %s203 = sphi 0, %s202
      %s217 = sphi 0, %s203
      %s221 = sphi 0, %s221
      %s223 = sphi 0, %s221
      %s224 = sphi 0, %s223
      %s238 = sphi 0, %s224
      %s242 = sphi 0, %s242
      %s244 = sphi 0, %s242
      %s245 = sphi 0, %s244
      %s259 = sphi 0, %s245
      %s263 = sphi 0, %s263
      %s265 = sphi 0, %s263
      %s266 = sphi 0, %s265
      %s280 = sphi 0, %s266
      %s284 = sphi 0, %s284
      %s286 = sphi 0, %s284
      %s287 = sphi 0, %s286
      %s301 = sphi 0, %s287
      %s309 = sphi 0, %s311
      %s312 = sphi 0, %s309
      %s313 = sphi 0, %s312
      %s329 = sphi 0, %s313
    $region4: #{tpu_custom_call.1} parent=1 // loop_header_branch
      %31 = sbr.rel (%p29) target = $region8
    $region5: #{tpu_custom_call.1} parent=1 // loop_body
      %s33 = ssub.s32 %s28, 1
      %s34 = ssub.s32 %s28, 2
      %s41 = sadd.s32 1, %s36
      %p42 = scmp.ge.s32.totalorder %s41, 1
      %s43 = scalar_select %p42, 0, %s41
      %s44 = sadd.s32 1, %s35
      %s45 = scalar_select %p42, %s44, %s35
      %p46 = scmp.ge.s32.totalorder %s45, 2
      %s47 = scalar_select %p46, 0, %s45
      %s49 = sadd.s32 %s48, 1
      %p52 = scmp.eq.s32.totalorder %s28, 1
      %p53 = scmp.ne.s32.totalorder %s48, %s50
      %p54 = scmp.eq.s32.totalorder %s28, 0
      %p55 = por %p53, %p54
      %p56 = scmp.ne.s32.totalorder %s48, %s50
      %p57 = scmp.eq.s32.totalorder %s33, 1
      %p58 = por %p56, %p57
      %p59 = scmp.ne.s32.totalorder %s50, %s51
      %p60 = scmp.eq.s32.totalorder %s33, 0
      %p61 = por %p59, %p60
      %p62 = scmp.ne.s32.totalorder %s50, %s51
      %p63 = scmp.eq.s32.totalorder %s34, 1
      %p64 = por %p62, %p63
      %p66 = scmp.ne.s32.totalorder %s51, %s65
      %p67 = scmp.eq.s32.totalorder %s34, 0
      %p68 = por %p66, %p67
      %s69 = ssub.s32 %s35, %s47
      %p70 = scmp.eq.s32.totalorder %s69, 0
      %s72 = sadd.s32 %s71, 1
      %s73 = scalar_select %p70, %s71, %s72
      %p76 = pneg %p70
      %p77 = scmp.eq.s32.totalorder %s28, 1
      %p78 = por %p76, %p77
      %p79 = scmp.ne.s32.totalorder %s71, %s74
      %p80 = scmp.eq.s32.totalorder %s28, 0
      %p81 = por %p79, %p80
      %p82 = scmp.ne.s32.totalorder %s71, %s74
      %p83 = scmp.eq.s32.totalorder %s33, 1
      %p84 = por %p82, %p83
      %p85 = scmp.ne.s32.totalorder %s74, %s75
      %p86 = scmp.eq.s32.totalorder %s33, 0
      %p87 = por %p85, %p86
      %p88 = scmp.ne.s32.totalorder %s74, %s75
      %p89 = scmp.eq.s32.totalorder %s34, 1
      %p90 = por %p88, %p89
      %p92 = scmp.ne.s32.totalorder %s75, %s91
      %p93 = scmp.eq.s32.totalorder %s34, 0
      %p94 = por %p92, %p93
      %s96 = sadd.s32 %s95, 1
      %p99 = scmp.eq.s32.totalorder %s28, 1
      %p100 = scmp.ne.s32.totalorder %s95, %s97
      %p101 = scmp.eq.s32.totalorder %s28, 0
      %p102 = por %p100, %p101
      %p103 = scmp.ne.s32.totalorder %s95, %s97
      %p104 = scmp.eq.s32.totalorder %s33, 1
      %p105 = por %p103, %p104
      %p106 = scmp.ne.s32.totalorder %s97, %s98
      %p107 = scmp.eq.s32.totalorder %s33, 0
      %p108 = por %p106, %p107
      %p109 = scmp.ne.s32.totalorder %s97, %s98
      %p110 = scmp.eq.s32.totalorder %s34, 1
      %p111 = por %p109, %p110
      %p113 = scmp.ne.s32.totalorder %s98, %s112
      %p114 = scmp.eq.s32.totalorder %s34, 0
      %p115 = por %p113, %p114
      %s117 = sadd.s32 %s116, 1
      %p120 = scmp.eq.s32.totalorder %s28, 1
      %p121 = scmp.ne.s32.totalorder %s116, %s118
      %p122 = scmp.eq.s32.totalorder %s28, 0
      %p123 = por %p121, %p122
      %p124 = scmp.ne.s32.totalorder %s116, %s118
      %p125 = scmp.eq.s32.totalorder %s33, 1
      %p126 = por %p124, %p125
      %p127 = scmp.ne.s32.totalorder %s118, %s119
      %p128 = scmp.eq.s32.totalorder %s33, 0
      %p129 = por %p127, %p128
      %p130 = scmp.ne.s32.totalorder %s118, %s119
      %p131 = scmp.eq.s32.totalorder %s34, 1
      %p132 = por %p130, %p131
      %p134 = scmp.ne.s32.totalorder %s119, %s133
      %p135 = scmp.eq.s32.totalorder %s34, 0
      %p136 = por %p134, %p135
      %s138 = sadd.s32 %s137, 1
      %p141 = scmp.eq.s32.totalorder %s28, 1
      %p142 = scmp.ne.s32.totalorder %s137, %s139
      %p143 = scmp.eq.s32.totalorder %s28, 0
      %p144 = por %p142, %p143
      %p145 = scmp.ne.s32.totalorder %s137, %s139
      %p146 = scmp.eq.s32.totalorder %s33, 1
      %p147 = por %p145, %p146
      %p148 = scmp.ne.s32.totalorder %s139, %s140
      %p149 = scmp.eq.s32.totalorder %s33, 0
      %p150 = por %p148, %p149
      %p151 = scmp.ne.s32.totalorder %s139, %s140
      %p152 = scmp.eq.s32.totalorder %s34, 1
      %p153 = por %p151, %p152
      %p155 = scmp.ne.s32.totalorder %s140, %s154
      %p156 = scmp.eq.s32.totalorder %s34, 0
      %p157 = por %p155, %p156
      %s159 = sadd.s32 %s158, 1
      %p162 = scmp.eq.s32.totalorder %s28, 1
      %p163 = scmp.ne.s32.totalorder %s158, %s160
      %p164 = scmp.eq.s32.totalorder %s28, 0
      %p165 = por %p163, %p164
      %p166 = scmp.ne.s32.totalorder %s158, %s160
      %p167 = scmp.eq.s32.totalorder %s33, 1
      %p168 = por %p166, %p167
      %p169 = scmp.ne.s32.totalorder %s160, %s161
      %p170 = scmp.eq.s32.totalorder %s33, 0
      %p171 = por %p169, %p170
      %p172 = scmp.ne.s32.totalorder %s160, %s161
      %p173 = scmp.eq.s32.totalorder %s34, 1
      %p174 = por %p172, %p173
      %p176 = scmp.ne.s32.totalorder %s161, %s175
      %p177 = scmp.eq.s32.totalorder %s34, 0
      %p178 = por %p176, %p177
      %s180 = sadd.s32 %s179, 1
      %p183 = scmp.eq.s32.totalorder %s28, 1
      %p184 = scmp.ne.s32.totalorder %s179, %s181
      %p185 = scmp.eq.s32.totalorder %s28, 0
      %p186 = por %p184, %p185
      %p187 = scmp.ne.s32.totalorder %s179, %s181
      %p188 = scmp.eq.s32.totalorder %s33, 1
      %p189 = por %p187, %p188
      %p190 = scmp.ne.s32.totalorder %s181, %s182
      %p191 = scmp.eq.s32.totalorder %s33, 0
      %p192 = por %p190, %p191
      %p193 = scmp.ne.s32.totalorder %s181, %s182
      %p194 = scmp.eq.s32.totalorder %s34, 1
      %p195 = por %p193, %p194
      %p197 = scmp.ne.s32.totalorder %s182, %s196
      %p198 = scmp.eq.s32.totalorder %s34, 0
      %p199 = por %p197, %p198
      %s201 = sadd.s32 %s200, 1
      %p204 = scmp.eq.s32.totalorder %s28, 1
      %p205 = scmp.ne.s32.totalorder %s200, %s202
      %p206 = scmp.eq.s32.totalorder %s28, 0
      %p207 = por %p205, %p206
      %p208 = scmp.ne.s32.totalorder %s200, %s202
      %p209 = scmp.eq.s32.totalorder %s33, 1
      %p210 = por %p208, %p209
      %p211 = scmp.ne.s32.totalorder %s202, %s203
      %p212 = scmp.eq.s32.totalorder %s33, 0
      %p213 = por %p211, %p212
      %p214 = scmp.ne.s32.totalorder %s202, %s203
      %p215 = scmp.eq.s32.totalorder %s34, 1
      %p216 = por %p214, %p215
      %p218 = scmp.ne.s32.totalorder %s203, %s217
      %p219 = scmp.eq.s32.totalorder %s34, 0
      %p220 = por %p218, %p219
      %s222 = sadd.s32 %s221, 1
      %p225 = scmp.eq.s32.totalorder %s28, 1
      %p226 = scmp.ne.s32.totalorder %s221, %s223
      %p227 = scmp.eq.s32.totalorder %s28, 0
      %p228 = por %p226, %p227
      %p229 = scmp.ne.s32.totalorder %s221, %s223
      %p230 = scmp.eq.s32.totalorder %s33, 1
      %p231 = por %p229, %p230
      %p232 = scmp.ne.s32.totalorder %s223, %s224
      %p233 = scmp.eq.s32.totalorder %s33, 0
      %p234 = por %p232, %p233
      %p235 = scmp.ne.s32.totalorder %s223, %s224
      %p236 = scmp.eq.s32.totalorder %s34, 1
      %p237 = por %p235, %p236
      %p239 = scmp.ne.s32.totalorder %s224, %s238
      %p240 = scmp.eq.s32.totalorder %s34, 0
      %p241 = por %p239, %p240
      %s243 = sadd.s32 %s242, 1
      %p246 = scmp.eq.s32.totalorder %s28, 1
      %p247 = scmp.ne.s32.totalorder %s242, %s244
      %p248 = scmp.eq.s32.totalorder %s28, 0
      %p249 = por %p247, %p248
      %p250 = scmp.ne.s32.totalorder %s242, %s244
      %p251 = scmp.eq.s32.totalorder %s33, 1
      %p252 = por %p250, %p251
      %p253 = scmp.ne.s32.totalorder %s244, %s245
      %p254 = scmp.eq.s32.totalorder %s33, 0
      %p255 = por %p253, %p254
      %p256 = scmp.ne.s32.totalorder %s244, %s245
      %p257 = scmp.eq.s32.totalorder %s34, 1
      %p258 = por %p256, %p257
      %p260 = scmp.ne.s32.totalorder %s245, %s259
      %p261 = scmp.eq.s32.totalorder %s34, 0
      %p262 = por %p260, %p261
      %s264 = sadd.s32 %s263, 1
      %p267 = scmp.eq.s32.totalorder %s28, 1
      %p268 = scmp.ne.s32.totalorder %s263, %s265
      %p269 = scmp.eq.s32.totalorder %s28, 0
      %p270 = por %p268, %p269
      %p271 = scmp.ne.s32.totalorder %s263, %s265
      %p272 = scmp.eq.s32.totalorder %s33, 1
      %p273 = por %p271, %p272
      %p274 = scmp.ne.s32.totalorder %s265, %s266
      %p275 = scmp.eq.s32.totalorder %s33, 0
      %p276 = por %p274, %p275
      %p277 = scmp.ne.s32.totalorder %s265, %s266
      %p278 = scmp.eq.s32.totalorder %s34, 1
      %p279 = por %p277, %p278
      %p281 = scmp.ne.s32.totalorder %s266, %s280
      %p282 = scmp.eq.s32.totalorder %s34, 0
      %p283 = por %p281, %p282
      %s285 = sadd.s32 %s284, 1
      %p288 = scmp.eq.s32.totalorder %s28, 1
      %p289 = scmp.ne.s32.totalorder %s284, %s286
      %p290 = scmp.eq.s32.totalorder %s28, 0
      %p291 = por %p289, %p290
      %p292 = scmp.ne.s32.totalorder %s284, %s286
      %p293 = scmp.eq.s32.totalorder %s33, 1
      %p294 = por %p292, %p293
      %p295 = scmp.ne.s32.totalorder %s286, %s287
      %p296 = scmp.eq.s32.totalorder %s33, 0
      %p297 = por %p295, %p296
      %p298 = scmp.ne.s32.totalorder %s286, %s287
      %p299 = scmp.eq.s32.totalorder %s34, 1
      %p300 = por %p298, %p299
      %p302 = scmp.ne.s32.totalorder %s287, %s301
      %p303 = scmp.eq.s32.totalorder %s34, 0
      %p304 = por %p302, %p303
      %s305 = ssub.s32 %s35, %s47
      %s306 = ssub.s32 %s36, %s43
      %s307 = sor.u32 %s305, %s306
      %p308 = scmp.eq.s32.totalorder %s307, 0
      %s310 = sadd.s32 %s309, 1
      %s311 = scalar_select %p308, %s309, %s310
      %p314 = pneg %p308
      %p315 = scmp.eq.s32.totalorder %s28, 1
      %p316 = por %p314, %p315
      %p317 = scmp.ne.s32.totalorder %s309, %s312
      %p318 = scmp.eq.s32.totalorder %s28, 0
      %p319 = por %p317, %p318
      %p320 = scmp.ne.s32.totalorder %s309, %s312
      %p321 = scmp.eq.s32.totalorder %s33, 1
      %p322 = por %p320, %p321
      %p323 = scmp.ne.s32.totalorder %s312, %s313
      %p324 = scmp.eq.s32.totalorder %s33, 0
      %p325 = por %p323, %p324
      %p326 = scmp.ne.s32.totalorder %s312, %s313
      %p327 = scmp.eq.s32.totalorder %s34, 1
      %p328 = por %p326, %p327
      %p330 = scmp.ne.s32.totalorder %s313, %s329
      %p331 = scmp.eq.s32.totalorder %s34, 0
      %p332 = por %p330, %p331
      %p333 = scmp.le.s32.totalorder 1, %s28
      %p334 = scmp.lt.s32.totalorder %s28, 3
      %p335 = pnand %p333, %p334
      %p336 = pneg %p335
      // Predicated region
      $region9: #{tpu_custom_call.1} parent=5 // pred_check
        _
      $region10: #{tpu_custom_call.1} parent=5 // pred_check_branch
        %338 = sbr.rel (%p335) target = $region12
      $region11: #{tpu_custom_call.1} parent=5 // pred_region
        %s339 = ssub.s32 %s28, 1
        // Predicated region
        $region13: #{tpu_custom_call.1} parent=11 // pred_check
          %p340 = pneg %p61
        $region14: #{tpu_custom_call.1} parent=11 // pred_check_branch
          %342 = sbr.rel (%p340) target = $region16
        $region15: #{tpu_custom_call.1} parent=11 // pred_region
          _
        $region16: #{tpu_custom_call.1} parent=11 // pred_fallthru
          _
        // Predicated region
        $region17: #{tpu_custom_call.1} parent=11 // pred_check
          %p343 = pneg %p108
        $region18: #{tpu_custom_call.1} parent=11 // pred_check_branch
          %345 = sbr.rel (%p343) target = $region20
        $region19: #{tpu_custom_call.1} parent=11 // pred_region
          %s347 = ssub.s32 256, 256
          %348 = vsyncadd [#allocation10], %s347
          %s349 = sshll.u32 [#allocation9], 4
          %s350 = int_to_ptr.vmem [resolvable:$true] %s349
          %355 = dma.hbm_to_vmem [thread:$0]  %s2, 256, %s350, [#allocation10], 64, 64, 4
        $region20: #{tpu_custom_call.1} parent=11 // pred_fallthru
          _
        // Predicated region
        $region21: #{tpu_custom_call.1} parent=11 // pred_check
          %p356 = pneg %p129
        $region22: #{tpu_custom_call.1} parent=11 // pred_check_branch
          %358 = sbr.rel (%p356) target = $region24
        $region23: #{tpu_custom_call.1} parent=11 // pred_region
          %s360 = ssub.s32 256, 256
          %361 = vsyncadd [#allocation10], %s360
          %s362 = sshll.u32 [#allocation11], 4
          %s363 = int_to_ptr.vmem [resolvable:$true] %s362
          %368 = dma.hbm_to_vmem [thread:$0]  %s3, 256, %s363, [#allocation10], 64, 64, 4
        $region24: #{tpu_custom_call.1} parent=11 // pred_fallthru
          _
        // Predicated region
        $region25: #{tpu_custom_call.1} parent=11 // pred_check
          %p369 = pneg %p150
        $region26: #{tpu_custom_call.1} parent=11 // pred_check_branch
          %371 = sbr.rel (%p369) target = $region28
        $region27: #{tpu_custom_call.1} parent=11 // pred_region
          _
        $region28: #{tpu_custom_call.1} parent=11 // pred_fallthru
          _
        // Predicated region
        $region29: #{tpu_custom_call.1} parent=11 // pred_check
          %p372 = pneg %p171
        $region30: #{tpu_custom_call.1} parent=11 // pred_check_branch
          %374 = sbr.rel (%p372) target = $region32
        $region31: #{tpu_custom_call.1} parent=11 // pred_region
          _
        $region32: #{tpu_custom_call.1} parent=11 // pred_fallthru
          _
        // Predicated region
        $region33: #{tpu_custom_call.1} parent=11 // pred_check
          %p375 = pneg %p192
        $region34: #{tpu_custom_call.1} parent=11 // pred_check_branch
          %377 = sbr.rel (%p375) target = $region36
        $region35: #{tpu_custom_call.1} parent=11 // pred_region
          %s379 = ssub.s32 256, 256
          %380 = vsyncadd [#allocation13], %s379
          %s381 = sshll.u32 [#allocation12], 4
          %s382 = int_to_ptr.vmem [resolvable:$true] %s381
          %387 = dma.hbm_to_vmem [thread:$0]  %s6, 256, %s382, [#allocation13], 64, 64, 4
        $region36: #{tpu_custom_call.1} parent=11 // pred_fallthru
          _
        // Predicated region
        $region37: #{tpu_custom_call.1} parent=11 // pred_check
          %p388 = pneg %p213
        $region38: #{tpu_custom_call.1} parent=11 // pred_check_branch
          %390 = sbr.rel (%p388) target = $region40
        $region39: #{tpu_custom_call.1} parent=11 // pred_region
          %s392 = ssub.s32 256, 256
          %393 = vsyncadd [#allocation13], %s392
          %s394 = sshll.u32 [#allocation14], 4
          %s395 = int_to_ptr.vmem [resolvable:$true] %s394
          %400 = dma.hbm_to_vmem [thread:$0]  %s7, 256, %s395, [#allocation13], 64, 64, 4
        $region40: #{tpu_custom_call.1} parent=11 // pred_fallthru
          _
        // Predicated region
        $region41: #{tpu_custom_call.1} parent=11 // pred_check
          %p401 = pneg %p234
        $region42: #{tpu_custom_call.1} parent=11 // pred_check_branch
          %403 = sbr.rel (%p401) target = $region44
        $region43: #{tpu_custom_call.1} parent=11 // pred_region
          %s405 = ssub.s32 16, 16
          %406 = vsyncadd [#allocation16], %s405
          %s408 = sshll.u32 [#allocation15], 4
          %s409 = int_to_ptr.vmem [resolvable:$true] %s408
          %411 = dma.hbm_to_vmem [thread:$0]  %s8, 16, %s409, [#allocation16]
        $region44: #{tpu_custom_call.1} parent=11 // pred_fallthru
          _
        // Predicated region
        $region45: #{tpu_custom_call.1} parent=11 // pred_check
          %p412 = pneg %p255
        $region46: #{tpu_custom_call.1} parent=11 // pred_check_branch
          %414 = sbr.rel (%p412) target = $region48
        $region47: #{tpu_custom_call.1} parent=11 // pred_region
          %s416 = ssub.s32 16, 16
          %417 = vsyncadd [#allocation16], %s416
          %s419 = sshll.u32 [#allocation17], 4
          %s420 = int_to_ptr.vmem [resolvable:$true] %s419
          %422 = dma.hbm_to_vmem [thread:$0]  %s9, 16, %s420, [#allocation16]
        $region48: #{tpu_custom_call.1} parent=11 // pred_fallthru
          _
        // Predicated region
        $region49: #{tpu_custom_call.1} parent=11 // pred_check
          %p423 = pneg %p276
        $region50: #{tpu_custom_call.1} parent=11 // pred_check_branch
          %425 = sbr.rel (%p423) target = $region52
        $region51: #{tpu_custom_call.1} parent=11 // pred_region
          _
        $region52: #{tpu_custom_call.1} parent=11 // pred_fallthru
          _
        // Predicated region
        $region53: #{tpu_custom_call.1} parent=11 // pred_check
          %p426 = pneg %p297
        $region54: #{tpu_custom_call.1} parent=11 // pred_check_branch
          %428 = sbr.rel (%p426) target = $region56
        $region55: #{tpu_custom_call.1} parent=11 // pred_region
          _
        $region56: #{tpu_custom_call.1} parent=11 // pred_fallthru
          _
      $region12: #{tpu_custom_call.1} parent=5 // pred_fallthru
        _
      %p429 = scmp.lt.s32.totalorder %s28, 2
      // Predicated region
      $region57: #{tpu_custom_call.1} parent=5 // pred_check
        %p430 = pneg %p429
      $region58: #{tpu_custom_call.1} parent=5 // pred_check_branch
        %432 = sbr.rel (%p430) target = $region60
      $region59: #{tpu_custom_call.1} parent=5 // pred_region
        // Predicated region
        $region61: #{tpu_custom_call.1} parent=59 // pred_check
          %p433 = pneg %p81
        $region62: #{tpu_custom_call.1} parent=59 // pred_check_branch
          %435 = sbr.rel (%p433) target = $region64
        $region63: #{tpu_custom_call.1} parent=59 // pred_region
          %s436 = sand.u32 %s71, 1
          %s437 = scalar_lea.sflag [#allocation7], %s436
          %s438 = sand.u32 %s71, 1
          %s439 = smul.addr %s438, 4
          %s440 = scalar_lea.vmem [#allocation6], %s439
          %s442 = ssub.s32 64, 64
          %443 = vsyncadd %s437, %s442
          %s444 = smul.addr %s35, 64
          %s445 = scalar_lea.hbm %s1, %s444
          %s447 = sshll.u32 %s440, 4
          %s448 = int_to_ptr.vmem [resolvable:$true] %s447
          %450 = dma.hbm_to_vmem [thread:$0]  %s445, 64, %s448, %s437
        $region64: #{tpu_custom_call.1} parent=59 // pred_fallthru
          _
      $region60: #{tpu_custom_call.1} parent=5 // pred_fallthru
        _
      %p451 = scmp.le.s32.totalorder 1, %s28
      %p452 = scmp.lt.s32.totalorder %s28, 3
      %p453 = pnand %p451, %p452
      %p454 = pneg %p453
      // Predicated region
      $region65: #{tpu_custom_call.1} parent=5 // pred_check
        _
      $region66: #{tpu_custom_call.1} parent=5 // pred_check_branch
        %456 = sbr.rel (%p453) target = $region68
      $region67: #{tpu_custom_call.1} parent=5 // pred_region
        %s457 = ssub.s32 %s28, 1
        %s458 = sand.u32 %s74, 1
        %s459 = scalar_lea.sflag [#allocation7], %s458
        %s460 = sand.u32 %s74, 1
        %s461 = smul.addr %s460, 4
        %s462 = scalar_lea.vmem [#allocation6], %s461
        // Predicated region
        $region69: #{tpu_custom_call.1} parent=67 // pred_check
          %p463 = pneg %p87
        $region70: #{tpu_custom_call.1} parent=67 // pred_check_branch
          %465 = sbr.rel (%p463) target = $region72
        $region71: #{tpu_custom_call.1} parent=67 // pred_region
          %466 = dma.done %s459, 64
        $region72: #{tpu_custom_call.1} parent=67 // pred_fallthru
          _
        // Predicated region
        $region73: #{tpu_custom_call.1} parent=67 // pred_check
          %p467 = pneg %p108
        $region74: #{tpu_custom_call.1} parent=67 // pred_check_branch
          %469 = sbr.rel (%p467) target = $region76
        $region75: #{tpu_custom_call.1} parent=67 // pred_region
          %470 = dma.done [#allocation10], 256
        $region76: #{tpu_custom_call.1} parent=67 // pred_fallthru
          _
        // Predicated region
        $region77: #{tpu_custom_call.1} parent=67 // pred_check
          %p471 = pneg %p129
        $region78: #{tpu_custom_call.1} parent=67 // pred_check_branch
          %473 = sbr.rel (%p471) target = $region80
        $region79: #{tpu_custom_call.1} parent=67 // pred_region
          %474 = dma.done [#allocation10], 256
        $region80: #{tpu_custom_call.1} parent=67 // pred_fallthru
          _
        // Predicated region
        $region81: #{tpu_custom_call.1} parent=67 // pred_check
          %p475 = pneg %p192
        $region82: #{tpu_custom_call.1} parent=67 // pred_check_branch
          %477 = sbr.rel (%p475) target = $region84
        $region83: #{tpu_custom_call.1} parent=67 // pred_region
          %478 = dma.done [#allocation13], 256
        $region84: #{tpu_custom_call.1} parent=67 // pred_fallthru
          _
        // Predicated region
        $region85: #{tpu_custom_call.1} parent=67 // pred_check
          %p479 = pneg %p213
        $region86: #{tpu_custom_call.1} parent=67 // pred_check_branch
          %481 = sbr.rel (%p479) target = $region88
        $region87: #{tpu_custom_call.1} parent=67 // pred_region
          %482 = dma.done [#allocation13], 256
        $region88: #{tpu_custom_call.1} parent=67 // pred_fallthru
          _
        // Predicated region
        $region89: #{tpu_custom_call.1} parent=67 // pred_check
          %p483 = pneg %p234
        $region90: #{tpu_custom_call.1} parent=67 // pred_check_branch
          %485 = sbr.rel (%p483) target = $region92
        $region91: #{tpu_custom_call.1} parent=67 // pred_region
          %486 = dma.done [#allocation16], 16
        $region92: #{tpu_custom_call.1} parent=67 // pred_fallthru
          _
        // Predicated region
        $region93: #{tpu_custom_call.1} parent=67 // pred_check
          %p487 = pneg %p255
        $region94: #{tpu_custom_call.1} parent=67 // pred_check_branch
          %489 = sbr.rel (%p487) target = $region96
        $region95: #{tpu_custom_call.1} parent=67 // pred_region
          %490 = dma.done [#allocation16], 16
        $region96: #{tpu_custom_call.1} parent=67 // pred_fallthru
          _
        %p491 = pneg %p61
        %p492 = pneg %p58
        %s493 = sand.u32 %s74, 1
        %s494 = scalar_lea.sflag [#allocation7], %s493
        %s495 = sand.u32 %s74, 1
        %s496 = smul.addr %s495, 4
        %s497 = scalar_lea.vmem [#allocation6], %s496
        %p498 = pneg %p87
        %p499 = pneg %p84
        %p500 = pneg %p108
        %p501 = pneg %p105
        %p502 = pneg %p129
        %p503 = pneg %p126
        %p504 = pneg %p150
        %p505 = pneg %p147
        %p506 = pneg %p171
        %p507 = pneg %p168
        %p508 = pneg %p192
        %p509 = pneg %p189
        %p510 = pneg %p213
        %p511 = pneg %p210
        %p512 = pneg %p234
        %p513 = pneg %p231
        %p514 = pneg %p255
        %p515 = pneg %p252
        %p516 = pneg %p276
        %p517 = pneg %p273
        %p518 = pneg %p297
        %p519 = pneg %p294
        %p520 = pneg %p325
        %p521 = pneg %p322
        %s522 = sand.u32 %s312, 1
        %s523 = scalar_lea.sflag [#allocation8], %s522
        %s524 = sand.u32 %s312, 1
        %s525 = smul.addr %s524, 8
        %s526 = scalar_lea.vmem [#allocation18], %s525
        %p528 = scmp.eq.s32.totalorder %s38, 0
        // Predicated region
        $region97: #{tpu_custom_call.1} parent=67 // pred_check
          %p529 = pneg %p528
        $region98: #{tpu_custom_call.1} parent=67 // pred_check_branch
          %531 = sbr.rel (%p529) target = $region100
        $region99: #{tpu_custom_call.1} parent=67 // pred_region
          %v532 = vld [vmem:[%s462] sm:$0xf]
          %v533 = vld [vmem:[#allocation12] sm:$0xf]
          %v534 = vld [vmem:[#allocation12 + $0x4] sm:$0xf]
          %v535 = vld [vmem:[#allocation12 + $0x8] sm:$0xf]
          %v536 = vld [vmem:[#allocation12 + $0xc] sm:$0xf]
          %v537 = vld [vmem:[#allocation15] sm:$0x1]
          %v539 = vlaneseq
          %v540 = vshrl.u32 %v539, 7
          %v541 = vsub.s32 0, %v540
          %v542 = vrot.slane %v537, %v541
          %v548 = vunpack.c.l.b16 %v533
          %v549 = vunpack.c.l.b16 %v534
          %v550 = vunpack.c.l.b16 %v535
          %v551 = vunpack.c.l.b16 %v536
          %v552 = vpack.c.b16 %v549, %v548
          %v553 = vpack.c.b16 %v551, %v550
          %vm556 = vcmask 261120
          %v558 = vsel %vm556, %v532, 0
          %560 = vmatprep.subr.bf16.mxu0 0
          %561 = vmatpush1.bf16.msra.mxu0 0
          %562 = vmatprep.subr.bf16.mxu0 0
          %563 = vmatpush1.bf16.msra.mxu0 0
          %564 = vmatprep.subr.bf16.mxu0 0
          %565 = vmatpush1.bf16.msra.mxu0 0
          %566 = vmatprep.subr.bf16.mxu0 0
          %567 = vmatpush1.bf16.msra.mxu0 0
          %568 = vmatprep.subr.bf16.mxu0 0
          %569 = vmatpush1.bf16.msra.mxu0 0
          %570 = vmatprep.subr.bf16.mxu0 0
          %571 = vmatpush1.bf16.msra.mxu0 0
          %572 = vmatprep.subr.bf16.mxu0 0
          %573 = vmatpush1.bf16.msra.mxu0 %v553
          %574 = vmatprep.subr.bf16.mxu0 0
          %575 = vmatpush1.bf16.msra.mxu0 %v552
          %576 = vmatprep.subr.bf16.mxu0 0
          %577 = vmatpush2.bf16.msra.mxu0 0
          %578 = vmatprep.subr.bf16.mxu0 0
          %579 = vmatpush2.bf16.msra.mxu0 0
          %580 = vmatprep.subr.bf16.mxu0 0
          %581 = vmatpush2.bf16.msra.mxu0 0
          %582 = vmatprep.subr.bf16.mxu0 0
          %583 = vmatpush2.bf16.msra.mxu0 0
          %584 = vmatprep.subr.bf16.mxu0 0
          %585 = vmatpush2.bf16.msra.mxu0 0
          %586 = vmatprep.subr.bf16.mxu0 0
          %587 = vmatpush2.bf16.msra.mxu0 0
          %588 = vmatprep.subr.bf16.mxu0 0
          %589 = vmatpush2.bf16.msra.mxu0 0
          %590 = vmatprep.subr.bf16.mxu0 0
          %591 = vmatpush2.bf16.msra.mxu0 0
          %592 = vmatprep.mubr.bf16.mxu0 0
          %593 = vmatmul.mubr.bf16.gmra.mxu0 %v558
          %v594 = vpop.f32.mrf.mxu0
          %v595 = vadd.f32 %v542, %v594
          %v596 = vpop.f32.mrf.mxu0
          %v597 = vpop.f32.mrf.mxu0
          %v598 = vpop.f32.mrf.mxu0
          %599 = vdwg.mxu0
          %v600 = vld [vmem:[#allocation14] sm:$0xf]
          %v601 = vld [vmem:[#allocation14 + $0x4] sm:$0xf]
          %v602 = vld [vmem:[#allocation14 + $0x8] sm:$0xf]
          %v603 = vld [vmem:[#allocation14 + $0xc] sm:$0xf]
          %v604 = vld [vmem:[#allocation17] sm:$0x1]
          %v606 = vlaneseq
          %v607 = vshrl.u32 %v606, 7
          %v608 = vsub.s32 0, %v607
          %v609 = vrot.slane %v604, %v608
          %v615 = vunpack.c.l.b16 %v600
          %v616 = vunpack.c.l.b16 %v601
          %v617 = vunpack.c.l.b16 %v602
          %v618 = vunpack.c.l.b16 %v603
          %v619 = vpack.c.b16 %v616, %v615
          %v620 = vpack.c.b16 %v618, %v617
          %623 = vmatprep.subr.bf16.mxu0 0
          %624 = vmatpush1.bf16.msra.mxu0 0
          %625 = vmatprep.subr.bf16.mxu0 0
          %626 = vmatpush1.bf16.msra.mxu0 0
          %627 = vmatprep.subr.bf16.mxu0 0
          %628 = vmatpush1.bf16.msra.mxu0 0
          %629 = vmatprep.subr.bf16.mxu0 0
          %630 = vmatpush1.bf16.msra.mxu0 0
          %631 = vmatprep.subr.bf16.mxu0 0
          %632 = vmatpush1.bf16.msra.mxu0 0
          %633 = vmatprep.subr.bf16.mxu0 0
          %634 = vmatpush1.bf16.msra.mxu0 0
          %635 = vmatprep.subr.bf16.mxu0 0
          %636 = vmatpush1.bf16.msra.mxu0 %v620
          %637 = vmatprep.subr.bf16.mxu0 0
          %638 = vmatpush1.bf16.msra.mxu0 %v619
          %639 = vmatprep.subr.bf16.mxu0 0
          %640 = vmatpush2.bf16.msra.mxu0 0
          %641 = vmatprep.subr.bf16.mxu0 0
          %642 = vmatpush2.bf16.msra.mxu0 0
          %643 = vmatprep.subr.bf16.mxu0 0
          %644 = vmatpush2.bf16.msra.mxu0 0
          %645 = vmatprep.subr.bf16.mxu0 0
          %646 = vmatpush2.bf16.msra.mxu0 0
          %647 = vmatprep.subr.bf16.mxu0 0
          %648 = vmatpush2.bf16.msra.mxu0 0
          %649 = vmatprep.subr.bf16.mxu0 0
          %650 = vmatpush2.bf16.msra.mxu0 0
          %651 = vmatprep.subr.bf16.mxu0 0
          %652 = vmatpush2.bf16.msra.mxu0 0
          %653 = vmatprep.subr.bf16.mxu0 0
          %654 = vmatpush2.bf16.msra.mxu0 0
          %655 = vmatprep.mubr.bf16.mxu0 0
          %656 = vmatmul.mubr.bf16.gmra.mxu0 %v558
          %v657 = vpop.f32.mrf.mxu0
          %v658 = vadd.f32 %v609, %v657
          %v659 = vpop.f32.mrf.mxu0
          %v660 = vpop.f32.mrf.mxu0
          %v661 = vpop.f32.mrf.mxu0
          %662 = vdwg.mxu0
          %v663 = vld [vmem:[%s10] sm:$0xf]
          %v664 = vld [vmem:[%s10 + $0x4] sm:$0xf]
          %v665 = vld [vmem:[%s10 + $0x8] sm:$0xf]
          %v666 = vld [vmem:[%s10 + $0xc] sm:$0xf]
          %v667 = vld [vmem:[%s11] sm:$0x1]
          %v669 = vlaneseq
          %v670 = vshrl.u32 %v669, 7
          %v671 = vsub.s32 0, %v670
          %v672 = vrot.slane %v667, %v671
          %v678 = vunpack.c.l.b16 %v663
          %v679 = vunpack.c.l.b16 %v664
          %v680 = vunpack.c.l.b16 %v665
          %v681 = vunpack.c.l.b16 %v666
          %v682 = vpack.c.b16 %v679, %v678
          %v683 = vpack.c.b16 %v681, %v680
          %686 = vmatprep.subr.bf16.mxu0 0
          %687 = vmatpush1.bf16.msra.mxu0 0
          %688 = vmatprep.subr.bf16.mxu0 0
          %689 = vmatpush1.bf16.msra.mxu0 0
          %690 = vmatprep.subr.bf16.mxu0 0
          %691 = vmatpush1.bf16.msra.mxu0 0
          %692 = vmatprep.subr.bf16.mxu0 0
          %693 = vmatpush1.bf16.msra.mxu0 0
          %694 = vmatprep.subr.bf16.mxu0 0
          %695 = vmatpush1.bf16.msra.mxu0 0
          %696 = vmatprep.subr.bf16.mxu0 0
          %697 = vmatpush1.bf16.msra.mxu0 0
          %698 = vmatprep.subr.bf16.mxu0 0
          %699 = vmatpush1.bf16.msra.mxu0 %v683
          %700 = vmatprep.subr.bf16.mxu0 0
          %701 = vmatpush1.bf16.msra.mxu0 %v682
          %702 = vmatprep.subr.bf16.mxu0 0
          %703 = vmatpush2.bf16.msra.mxu0 0
          %704 = vmatprep.subr.bf16.mxu0 0
          %705 = vmatpush2.bf16.msra.mxu0 0
          %706 = vmatprep.subr.bf16.mxu0 0
          %707 = vmatpush2.bf16.msra.mxu0 0
          %708 = vmatprep.subr.bf16.mxu0 0
          %709 = vmatpush2.bf16.msra.mxu0 0
          %710 = vmatprep.subr.bf16.mxu0 0
          %711 = vmatpush2.bf16.msra.mxu0 0
          %712 = vmatprep.subr.bf16.mxu0 0
          %713 = vmatpush2.bf16.msra.mxu0 0
          %714 = vmatprep.subr.bf16.mxu0 0
          %715 = vmatpush2.bf16.msra.mxu0 0
          %716 = vmatprep.subr.bf16.mxu0 0
          %717 = vmatpush2.bf16.msra.mxu0 0
          %718 = vmatprep.mubr.bf16.mxu0 0
          %719 = vmatmul.mubr.bf16.gmra.mxu0 %v558
          %v720 = vpop.f32.mrf.mxu0
          %v721 = vadd.f32 %v672, %v720
          %v722 = vpop.f32.mrf.mxu0
          %v723 = vpop.f32.mrf.mxu0
          %v724 = vpop.f32.mrf.mxu0
          %725 = vdwg.mxu0
          %726 = vxpose.xlu0.b32.start [1/16] %v595, 128
          %727 = vxpose.xlu0.b32.cont [2/16] 0.0, 128
          %728 = vxpose.xlu0.b32.cont [3/16] 0.0, 128
          %729 = vxpose.xlu0.b32.cont [4/16] 0.0, 128
          %730 = vxpose.xlu0.b32.cont [5/16] 0.0, 128
          %731 = vxpose.xlu0.b32.cont [6/16] 0.0, 128
          %732 = vxpose.xlu0.b32.cont [7/16] 0.0, 128
          %733 = vxpose.xlu0.b32.cont [8/16] 0.0, 128
          %734 = vxpose.xlu0.b32.cont [9/16] 0.0, 128
          %735 = vxpose.xlu0.b32.cont [10/16] 0.0, 128
          %736 = vxpose.xlu0.b32.cont [11/16] 0.0, 128
          %737 = vxpose.xlu0.b32.cont [12/16] 0.0, 128
          %738 = vxpose.xlu0.b32.cont [13/16] 0.0, 128
          %739 = vxpose.xlu0.b32.cont [14/16] 0.0, 128
          %740 = vxpose.xlu0.b32.cont [15/16] 0.0, 128
          %741 = vxpose.xlu0.b32.end [16/16] 0.0, 128
          %v742 = vpop.trf.xlu0
          %v743 = vpop.trf.xlu0
          %v744 = vpop.trf.xlu0
          %v745 = vpop.trf.xlu0
          %v746 = vpop.trf.xlu0
          %v747 = vpop.trf.xlu0
          %v748 = vpop.trf.xlu0
          %v749 = vpop.trf.xlu0
          %v750 = vpop.trf.xlu0
          %v751 = vpop.trf.xlu0
          %v752 = vpop.trf.xlu0
          %v753 = vpop.trf.xlu0
          %v754 = vpop.trf.xlu0
          %v755 = vpop.trf.xlu0
          %v756 = vpop.trf.xlu0
          %v757 = vpop.trf.xlu0
          %v758 = vpack.c.bf16 %v743, %v742
          %v759 = vpack.c.bf16 %v745, %v744
          %v762 = vunpack.c.l.b16 %v758
          %v763 = vunpack.c.h.b16 %v758
          %v764 = vunpack.c.l.b16 %v759
          %v765 = vunpack.c.h.b16 %v759
          %v766 = vpack.c.b16 %v762, %v762
          %v767 = vpack.c.b16 %v763, %v763
          %v768 = vpack.c.b16 %v764, %v764
          %v769 = vpack.c.b16 %v765, %v765
          %vm774 = vcmask 60416
          %775 = vst.msk [vmem:[#allocation2] sm:$0xf] %vm774, %v766
          %776 = vst.msk [vmem:[#allocation2 + $0x4] sm:$0xf] %vm774, %v767
          %777 = vst.msk [vmem:[#allocation2 + $0x8] sm:$0xf] %vm774, %v768
          %778 = vst.msk [vmem:[#allocation2 + $0xc] sm:$0xf] %vm774, %v769
          %779 = vxpose.xlu0.b32.start [1/16] %v658, 128
          %780 = vxpose.xlu0.b32.cont [2/16] 0.0, 128
          %781 = vxpose.xlu0.b32.cont [3/16] 0.0, 128
          %782 = vxpose.xlu0.b32.cont [4/16] 0.0, 128
          %783 = vxpose.xlu0.b32.cont [5/16] 0.0, 128
          %784 = vxpose.xlu0.b32.cont [6/16] 0.0, 128
          %785 = vxpose.xlu0.b32.cont [7/16] 0.0, 128
          %786 = vxpose.xlu0.b32.cont [8/16] 0.0, 128
          %787 = vxpose.xlu0.b32.cont [9/16] 0.0, 128
          %788 = vxpose.xlu0.b32.cont [10/16] 0.0, 128
          %789 = vxpose.xlu0.b32.cont [11/16] 0.0, 128
          %790 = vxpose.xlu0.b32.cont [12/16] 0.0, 128
          %791 = vxpose.xlu0.b32.cont [13/16] 0.0, 128
          %792 = vxpose.xlu0.b32.cont [14/16] 0.0, 128
          %793 = vxpose.xlu0.b32.cont [15/16] 0.0, 128
          %794 = vxpose.xlu0.b32.end [16/16] 0.0, 128
          %v795 = vpop.trf.xlu0
          %v796 = vpop.trf.xlu0
          %v797 = vpop.trf.xlu0
          %v798 = vpop.trf.xlu0
          %v799 = vpop.trf.xlu0
          %v800 = vpop.trf.xlu0
          %v801 = vpop.trf.xlu0
          %v802 = vpop.trf.xlu0
          %v803 = vpop.trf.xlu0
          %v804 = vpop.trf.xlu0
          %v805 = vpop.trf.xlu0
          %v806 = vpop.trf.xlu0
          %v807 = vpop.trf.xlu0
          %v808 = vpop.trf.xlu0
          %v809 = vpop.trf.xlu0
          %v810 = vpop.trf.xlu0
          %v811 = vpack.c.bf16 %v796, %v795
          %v812 = vpack.c.bf16 %v798, %v797
          %v815 = vunpack.c.l.b16 %v811
          %v816 = vunpack.c.h.b16 %v811
          %v817 = vunpack.c.l.b16 %v812
          %v818 = vunpack.c.h.b16 %v812
          %v819 = vpack.c.b16 %v815, %v815
          %v820 = vpack.c.b16 %v816, %v816
          %v821 = vpack.c.b16 %v817, %v817
          %v822 = vpack.c.b16 %v818, %v818
          %827 = vst.msk [vmem:[#allocation3] sm:$0xf] %vm774, %v819
          %828 = vst.msk [vmem:[#allocation3 + $0x4] sm:$0xf] %vm774, %v820
          %829 = vst.msk [vmem:[#allocation3 + $0x8] sm:$0xf] %vm774, %v821
          %830 = vst.msk [vmem:[#allocation3 + $0xc] sm:$0xf] %vm774, %v822
          %v831 = vpack.c.bf16 %v721, %v721
          %vm832 = vcmask 257024
          %833 = vst.msk [vmem:[#allocation4] sm:$0xf] %vm832, %v831
        $region100: #{tpu_custom_call.1} parent=67 // pred_fallthru
          _
        %s834 = smul.u32 %s38, 8
        %s835 = sshra.s32 %s834, 3
        %s836 = sand.u32 %s834, 7
        %s837 = smul.addr %s835, 4
        %s838 = scalar_lea.vmem %s462, %s837 [#allocation6]
        %v839 = vld [vmem:[%s838] sm:$0xf]
        %v840 = vld [vmem:[#allocation9] sm:$0xf]
        %v841 = vld [vmem:[#allocation9 + $0x4] sm:$0xf]
        %v842 = vld [vmem:[#allocation9 + $0x8] sm:$0xf]
        %v843 = vld [vmem:[#allocation9 + $0xc] sm:$0xf]
        %v844 = vld [vmem:[%s4] sm:$0x1]
        %v846 = vlaneseq
        %v847 = vshrl.u32 %v846, 7
        %v848 = vsub.s32 0, %v847
        %v849 = vrot.slane %v844, %v848
        %v855 = vunpack.c.l.b16 %v840
        %v856 = vunpack.c.l.b16 %v841
        %v857 = vunpack.c.l.b16 %v842
        %v858 = vunpack.c.l.b16 %v843
        %v859 = vpack.c.b16 %v856, %v855
        %v860 = vpack.c.b16 %v858, %v857
        %vm863 = vcmask 261120
        %v865 = vsel %vm863, %v839, 0
        %867 = vmatprep.subr.bf16.mxu0 0
        %868 = vmatpush1.bf16.msra.mxu0 0
        %869 = vmatprep.subr.bf16.mxu0 0
        %870 = vmatpush1.bf16.msra.mxu0 0
        %871 = vmatprep.subr.bf16.mxu0 0
        %872 = vmatpush1.bf16.msra.mxu0 0
        %873 = vmatprep.subr.bf16.mxu0 0
        %874 = vmatpush1.bf16.msra.mxu0 0
        %875 = vmatprep.subr.bf16.mxu0 0
        %876 = vmatpush1.bf16.msra.mxu0 0
        %877 = vmatprep.subr.bf16.mxu0 0
        %878 = vmatpush1.bf16.msra.mxu0 0
        %879 = vmatprep.subr.bf16.mxu0 0
        %880 = vmatpush1.bf16.msra.mxu0 %v860
        %881 = vmatprep.subr.bf16.mxu0 0
        %882 = vmatpush1.bf16.msra.mxu0 %v859
        %883 = vmatprep.subr.bf16.mxu0 0
        %884 = vmatpush2.bf16.msra.mxu0 0
        %885 = vmatprep.subr.bf16.mxu0 0
        %886 = vmatpush2.bf16.msra.mxu0 0
        %887 = vmatprep.subr.bf16.mxu0 0
        %888 = vmatpush2.bf16.msra.mxu0 0
        %889 = vmatprep.subr.bf16.mxu0 0
        %890 = vmatpush2.bf16.msra.mxu0 0
        %891 = vmatprep.subr.bf16.mxu0 0
        %892 = vmatpush2.bf16.msra.mxu0 0
        %893 = vmatprep.subr.bf16.mxu0 0
        %894 = vmatpush2.bf16.msra.mxu0 0
        %895 = vmatprep.subr.bf16.mxu0 0
        %896 = vmatpush2.bf16.msra.mxu0 0
        %897 = vmatprep.subr.bf16.mxu0 0
        %898 = vmatpush2.bf16.msra.mxu0 0
        %899 = vmatprep.mubr.bf16.mxu0 0
        %900 = vmatmul.mubr.bf16.gmra.mxu0 %v865
        %v901 = vpop.f32.mrf.mxu0
        %v902 = vadd.f32 %v849, %v901
        %v903 = vpop.f32.mrf.mxu0
        %v904 = vpop.f32.mrf.mxu0
        %v905 = vpop.f32.mrf.mxu0
        %906 = vdwg.mxu0
        %v907 = vld [vmem:[#allocation11] sm:$0xf]
        %v908 = vld [vmem:[#allocation11 + $0x4] sm:$0xf]
        %v909 = vld [vmem:[#allocation11 + $0x8] sm:$0xf]
        %v910 = vld [vmem:[#allocation11 + $0xc] sm:$0xf]
        %v911 = vld [vmem:[%s5] sm:$0x1]
        %v913 = vlaneseq
        %v914 = vshrl.u32 %v913, 7
        %v915 = vsub.s32 0, %v914
        %v916 = vrot.slane %v911, %v915
        %v922 = vunpack.c.l.b16 %v907
        %v923 = vunpack.c.l.b16 %v908
        %v924 = vunpack.c.l.b16 %v909
        %v925 = vunpack.c.l.b16 %v910
        %v926 = vpack.c.b16 %v923, %v922
        %v927 = vpack.c.b16 %v925, %v924
        %930 = vmatprep.subr.bf16.mxu0 0
        %931 = vmatpush1.bf16.msra.mxu0 0
        %932 = vmatprep.subr.bf16.mxu0 0
        %933 = vmatpush1.bf16.msra.mxu0 0
        %934 = vmatprep.subr.bf16.mxu0 0
        %935 = vmatpush1.bf16.msra.mxu0 0
        %936 = vmatprep.subr.bf16.mxu0 0
        %937 = vmatpush1.bf16.msra.mxu0 0
        %938 = vmatprep.subr.bf16.mxu0 0
        %939 = vmatpush1.bf16.msra.mxu0 0
        %940 = vmatprep.subr.bf16.mxu0 0
        %941 = vmatpush1.bf16.msra.mxu0 0
        %942 = vmatprep.subr.bf16.mxu0 0
        %943 = vmatpush1.bf16.msra.mxu0 %v927
        %944 = vmatprep.subr.bf16.mxu0 0
        %945 = vmatpush1.bf16.msra.mxu0 %v926
        %946 = vmatprep.subr.bf16.mxu0 0
        %947 = vmatpush2.bf16.msra.mxu0 0
        %948 = vmatprep.subr.bf16.mxu0 0
        %949 = vmatpush2.bf16.msra.mxu0 0
        %950 = vmatprep.subr.bf16.mxu0 0
        %951 = vmatpush2.bf16.msra.mxu0 0
        %952 = vmatprep.subr.bf16.mxu0 0
        %953 = vmatpush2.bf16.msra.mxu0 0
        %954 = vmatprep.subr.bf16.mxu0 0
        %955 = vmatpush2.bf16.msra.mxu0 0
        %956 = vmatprep.subr.bf16.mxu0 0
        %957 = vmatpush2.bf16.msra.mxu0 0
        %958 = vmatprep.subr.bf16.mxu0 0
        %959 = vmatpush2.bf16.msra.mxu0 0
        %960 = vmatprep.subr.bf16.mxu0 0
        %961 = vmatpush2.bf16.msra.mxu0 0
        %962 = vmatprep.mubr.bf16.mxu0 0
        %963 = vmatmul.mubr.bf16.gmra.mxu0 %v865
        %v964 = vpop.f32.mrf.mxu0
        %v965 = vadd.f32 %v916, %v964
        %v966 = vpop.f32.mrf.mxu0
        %v967 = vpop.f32.mrf.mxu0
        %v968 = vpop.f32.mrf.mxu0
        %969 = vdwg.mxu0
        %v970 = vmul.f32 %v902, 0.17677669
        %v971 = vpack.c.bf16 %v970, %v970
        %v972 = vmul.f32 %v965, 0.17677669
        %v973 = vpack.c.bf16 %v972, %v972
        %v974 = vld [vmem:[#allocation2] sm:$0xf]
        %v975 = vld [vmem:[#allocation2 + $0x4] sm:$0xf]
        %v976 = vld [vmem:[#allocation2 + $0x8] sm:$0xf]
        %v977 = vld [vmem:[#allocation2 + $0xc] sm:$0xf]
        %v982 = vunpack.c.l.b16 %v974
        %v983 = vunpack.c.l.b16 %v975
        %v984 = vunpack.c.l.b16 %v976
        %v985 = vunpack.c.l.b16 %v977
        %v986 = vpack.c.b16 %v983, %v982
        %v987 = vpack.c.b16 %v985, %v984
        %v991 = vsel %vm863, %v971, 0
        %993 = vmatprep.subr.bf16.mxu0 0
        %994 = vmatpush1.bf16.msra.mxu0 0
        %995 = vmatprep.subr.bf16.mxu0 0
        %996 = vmatpush1.bf16.msra.mxu0 0
        %997 = vmatprep.subr.bf16.mxu0 0
        %998 = vmatpush1.bf16.msra.mxu0 0
        %999 = vmatprep.subr.bf16.mxu0 0
        %1000 = vmatpush1.bf16.msra.mxu0 0
        %1001 = vmatprep.subr.bf16.mxu0 0
        %1002 = vmatpush1.bf16.msra.mxu0 0
        %1003 = vmatprep.subr.bf16.mxu0 0
        %1004 = vmatpush1.bf16.msra.mxu0 0
        %1005 = vmatprep.subr.bf16.mxu0 0
        %1006 = vmatpush1.bf16.msra.mxu0 %v987
        %1007 = vmatprep.subr.bf16.mxu0 0
        %1008 = vmatpush1.bf16.msra.mxu0 %v986
        %1009 = vmatprep.subr.bf16.mxu0 0
        %1010 = vmatpush2.bf16.msra.mxu0 0
        %1011 = vmatprep.subr.bf16.mxu0 0
        %1012 = vmatpush2.bf16.msra.mxu0 0
        %1013 = vmatprep.subr.bf16.mxu0 0
        %1014 = vmatpush2.bf16.msra.mxu0 0
        %1015 = vmatprep.subr.bf16.mxu0 0
        %1016 = vmatpush2.bf16.msra.mxu0 0
        %1017 = vmatprep.subr.bf16.mxu0 0
        %1018 = vmatpush2.bf16.msra.mxu0 0
        %1019 = vmatprep.subr.bf16.mxu0 0
        %1020 = vmatpush2.bf16.msra.mxu0 0
        %1021 = vmatprep.subr.bf16.mxu0 0
        %1022 = vmatpush2.bf16.msra.mxu0 0
        %1023 = vmatprep.subr.bf16.mxu0 0
        %1024 = vmatpush2.bf16.msra.mxu0 0
        %1025 = vmatprep.mubr.bf16.mxu0 0
        %1026 = vmatmul.mubr.bf16.gmra.mxu0 %v991
        %v1027 = vpop.f32.mrf.mxu0
        %v1028 = vadd.f32 0.0, %v1027
        %v1029 = vpop.f32.mrf.mxu0
        %v1030 = vpop.f32.mrf.mxu0
        %v1031 = vpop.f32.mrf.mxu0
        %1032 = vdwg.mxu0
        %v1033 = vld [vmem:[#allocation3] sm:$0xf]
        %v1034 = vld [vmem:[#allocation3 + $0x4] sm:$0xf]
        %v1035 = vld [vmem:[#allocation3 + $0x8] sm:$0xf]
        %v1036 = vld [vmem:[#allocation3 + $0xc] sm:$0xf]
        %v1041 = vunpack.c.l.b16 %v1033
        %v1042 = vunpack.c.l.b16 %v1034
        %v1043 = vunpack.c.l.b16 %v1035
        %v1044 = vunpack.c.l.b16 %v1036
        %v1045 = vpack.c.b16 %v1042, %v1041
        %v1046 = vpack.c.b16 %v1044, %v1043
        %v1050 = vsel %vm863, %v973, 0
        %1052 = vmatprep.subr.bf16.mxu0 0
        %1053 = vmatpush1.bf16.msra.mxu0 0
        %1054 = vmatprep.subr.bf16.mxu0 0
        %1055 = vmatpush1.bf16.msra.mxu0 0
        %1056 = vmatprep.subr.bf16.mxu0 0
        %1057 = vmatpush1.bf16.msra.mxu0 0
        %1058 = vmatprep.subr.bf16.mxu0 0
        %1059 = vmatpush1.bf16.msra.mxu0 0
        %1060 = vmatprep.subr.bf16.mxu0 0
        %1061 = vmatpush1.bf16.msra.mxu0 0
        %1062 = vmatprep.subr.bf16.mxu0 0
        %1063 = vmatpush1.bf16.msra.mxu0 0
        %1064 = vmatprep.subr.bf16.mxu0 0
        %1065 = vmatpush1.bf16.msra.mxu0 %v1046
        %1066 = vmatprep.subr.bf16.mxu0 0
        %1067 = vmatpush1.bf16.msra.mxu0 %v1045
        %1068 = vmatprep.subr.bf16.mxu0 0
        %1069 = vmatpush2.bf16.msra.mxu0 0
        %1070 = vmatprep.subr.bf16.mxu0 0
        %1071 = vmatpush2.bf16.msra.mxu0 0
        %1072 = vmatprep.subr.bf16.mxu0 0
        %1073 = vmatpush2.bf16.msra.mxu0 0
        %1074 = vmatprep.subr.bf16.mxu0 0
        %1075 = vmatpush2.bf16.msra.mxu0 0
        %1076 = vmatprep.subr.bf16.mxu0 0
        %1077 = vmatpush2.bf16.msra.mxu0 0
        %1078 = vmatprep.subr.bf16.mxu0 0
        %1079 = vmatpush2.bf16.msra.mxu0 0
        %1080 = vmatprep.subr.bf16.mxu0 0
        %1081 = vmatpush2.bf16.msra.mxu0 0
        %1082 = vmatprep.subr.bf16.mxu0 0
        %1083 = vmatpush2.bf16.msra.mxu0 0
        %1084 = vmatprep.mubr.bf16.mxu0 0
        %1085 = vmatmul.mubr.bf16.gmra.mxu0 %v1050
        %v1086 = vpop.f32.mrf.mxu0
        %v1087 = vadd.f32 0.0, %v1086
        %v1088 = vpop.f32.mrf.mxu0
        %v1089 = vpop.f32.mrf.mxu0
        %v1090 = vpop.f32.mrf.mxu0
        %1091 = vdwg.mxu0
        %vm1092 = vcmask 64512
        %v1093 = vsel %vm1092, %v1028, -inf
        %1094 = vmax.xlane.f32.xlu0 %v1093
        %v1095 = vpop.xlane.xlu0 %1094
        %v1096 = vsel %vm1092, %v1087, -inf
        %1097 = vmax.xlane.f32.xlu0 %v1096
        %v1098 = vpop.xlane.xlu0 %1097
        %v1099 = vsub.f32 %v1028, %v1095
        %v1100 = vmul.f32 %v1099, 1.442695
        %v1101 = vpow.pop %v1100
        %v1102 = vsub.f32 %v1087, %v1098
        %v1103 = vmul.f32 %v1102, 1.442695
        %v1104 = vpow.pop %v1103
        %v1105 = vsel %vm1092, %v1101, 0.0
        %1106 = vadd.xlane.f32.xlu0 %v1105
        %v1107 = vpop.xlane.xlu0 %1106
        %v1108 = vrcp.pop %v1107
        %v1109 = vsel %vm1092, %v1104, 0.0
        %1110 = vadd.xlane.f32.xlu0 %v1109
        %v1111 = vpop.xlane.xlu0 %1110
        %v1112 = vrcp.pop %v1111
        %s1113 = sld [smem:[#allocation5]]
        %v1114 = vmul.f32 %v1101, %v1108
        %v1115 = vstv %s1113
        %v1116 = vmul.f32 %v1115, %v1112
        %v1117 = vmul.f32 %v1104, %v1116
        %v1118 = vsub.f32 %v1114, %v1117
        %v1119 = vpack.c.bf16 %v1118, %v1118
        %v1120 = vld [vmem:[#allocation4] sm:$0xf]
        %v1122 = vsel %vm1092, %v1119, 0
        %vm1124 = vcmask 1043456
        %v1126 = vsel %vm1124, %v1120, 0
        %1128 = vmatprep.subr.bf16.mxu0 0
        %1129 = vmatpush1.bf16.msra.mxu0 0
        %1130 = vmatprep.subr.bf16.mxu0 0
        %1131 = vmatpush1.bf16.msra.mxu0 0
        %1132 = vmatprep.subr.bf16.mxu0 0
        %1133 = vmatpush1.bf16.msra.mxu0 0
        %1134 = vmatprep.subr.bf16.mxu0 0
        %1135 = vmatpush1.bf16.msra.mxu0 0
        %1136 = vmatprep.subr.bf16.mxu0 0
        %1137 = vmatpush1.bf16.msra.mxu0 0
        %1138 = vmatprep.subr.bf16.mxu0 0
        %1139 = vmatpush1.bf16.msra.mxu0 0
        %1140 = vmatprep.subr.bf16.mxu0 0
        %1141 = vmatpush1.bf16.msra.mxu0 0
        %1142 = vmatprep.subr.bf16.mxu0 0
        %1143 = vmatpush1.bf16.msra.mxu0 %v1126
        %1144 = vmatprep.subr.bf16.mxu0 0
        %1145 = vmatpush2.bf16.msra.mxu0 0
        %1146 = vmatprep.subr.bf16.mxu0 0
        %1147 = vmatpush2.bf16.msra.mxu0 0
        %1148 = vmatprep.subr.bf16.mxu0 0
        %1149 = vmatpush2.bf16.msra.mxu0 0
        %1150 = vmatprep.subr.bf16.mxu0 0
        %1151 = vmatpush2.bf16.msra.mxu0 0
        %1152 = vmatprep.subr.bf16.mxu0 0
        %1153 = vmatpush2.bf16.msra.mxu0 0
        %1154 = vmatprep.subr.bf16.mxu0 0
        %1155 = vmatpush2.bf16.msra.mxu0 0
        %1156 = vmatprep.subr.bf16.mxu0 0
        %1157 = vmatpush2.bf16.msra.mxu0 0
        %1158 = vmatprep.subr.bf16.mxu0 0
        %1159 = vmatpush2.bf16.msra.mxu0 0
        %1160 = vmatprep.mubr.bf16.mxu0 0
        %1161 = vmatmul.mubr.bf16.gmra.mxu0 %v1122
        %v1162 = vpop.f32.mrf.mxu0
        %v1163 = vadd.f32 0.0, %v1162
        %v1164 = vpop.f32.mrf.mxu0
        %v1165 = vpop.f32.mrf.mxu0
        %v1166 = vpop.f32.mrf.mxu0
        %1167 = vdwg.mxu0
        %1168 = vst.msk [vmem:[%s526] sm:$0xff] %vm863, %v1163
        %s1169 = sand.u32 %s312, 1
        %s1170 = scalar_lea.sflag [#allocation8], %s1169
        %s1171 = sand.u32 %s312, 1
        %s1172 = smul.addr %s1171, 8
        %s1173 = scalar_lea.vmem [#allocation18], %s1172
        // Predicated region
        $region101: #{tpu_custom_call.1} parent=67 // pred_check
          %p1174 = pneg %p322
        $region102: #{tpu_custom_call.1} parent=67 // pred_check_branch
          %1176 = sbr.rel (%p1174) target = $region104
        $region103: #{tpu_custom_call.1} parent=67 // pred_region
          %s1178 = ssub.s32 128, 128
          %1179 = vsyncadd %s1170, %s1178
          %s1180 = sadd.s32 %s38, %s37
          %s1181 = smul.addr %s1180, 128
          %s1182 = scalar_lea.hbm %s12, %s1181
          %s1184 = sshll.u32 %s1173, 4
          %s1185 = int_to_ptr.vmem [resolvable:$true] %s1184
          %1187 = dma.vmem_to_hbm [thread:$0]  %s1185, 128, %s1182, %s1170
        $region104: #{tpu_custom_call.1} parent=67 // pred_fallthru
          _
      $region68: #{tpu_custom_call.1} parent=5 // pred_fallthru
        _
      %p1188 = scmp.le.s32.totalorder 2, %s28
      // Predicated region
      $region105: #{tpu_custom_call.1} parent=5 // pred_check
        %p1189 = pneg %p1188
      $region106: #{tpu_custom_call.1} parent=5 // pred_check_branch
        %1191 = sbr.rel (%p1189) target = $region108
      $region107: #{tpu_custom_call.1} parent=5 // pred_region
        %s1192 = ssub.s32 %s28, 2
        // Predicated region
        $region109: #{tpu_custom_call.1} parent=107 // pred_check
          %p1193 = pneg %p328
        $region110: #{tpu_custom_call.1} parent=107 // pred_check_branch
          %1195 = sbr.rel (%p1193) target = $region112
        $region111: #{tpu_custom_call.1} parent=107 // pred_region
          %s1196 = sand.u32 %s313, 1
          %s1197 = scalar_lea.sflag [#allocation8], %s1196
          %s1198 = sand.u32 %s313, 1
          %s1199 = smul.addr %s1198, 8
          %s1200 = scalar_lea.vmem [#allocation18], %s1199
          %1201 = dma.done %s1197, 128
        $region112: #{tpu_custom_call.1} parent=107 // pred_fallthru
          _
      $region108: #{tpu_custom_call.1} parent=5 // pred_fallthru
        _
    $region6: #{tpu_custom_call.1} parent=1 // loop_footer
      %s32 = sadd.s32 1, %s28
    $region7: #{tpu_custom_call.1} parent=1 // loop_footer_branch
      %27 = sbr.rel target = $region3
    $region8: #{tpu_custom_call.1} parent=1 // loop_exit
      _
    %1202 = vsyncpa [#allocation7], 1
    %s1203 = scalar_lea.sflag [#allocation7], 1
    %1204 = vsyncpa %s1203, 1
    %1205 = vsyncpa [#allocation10], 1
    %1206 = vsyncpa [#allocation13], 1
    %1207 = vsyncpa [#allocation16], 1
    %1208 = vsyncpa [#allocation8], 1
    %s1209 = scalar_lea.sflag [#allocation8], 1
    %1210 = vsyncpa %s1209, 1

</llo_original>
